<compile_context>
chip_gen: v7x
topology: tpu7x:2x2x1
jax: 0.10.0
libtpu: 0.0.40
codegen_flags: <defaults>
</compile_context>

<pallas_src>
import jax
import jax.numpy as jnp
import numpy as np
from jax.experimental import pallas as pl
from jax.experimental.pallas import tpu as pltpu

# ---------------- problem sizes (small, consistent with the module) -----------
B = 2            # batch
T = 8            # sequence length of old_s_a
IN_DIM = 4       # pa.lstm_input_dim
H = 32           # pa.lstm_hidden_size
L = 1            # pa.lstm_num_layers (kernel implements the 1-layer case)
OUT_DIM = 1      # pa.lstm_output_dim (must be 1 for squeeze(message, 2))
S = 16           # state feature dim
PPO_IN = T + S   # pa.ppo_network_input_dim = 24
FC = 128

assert 4 * H == FC == 128, "kernel assumes 4H == 128 so the gates fit one lane tile"
assert 2 * H + 1 <= FC, "merged output tile must fit h, c and value in 128 lanes"

# ---------------- small "recurrence" pack (VMEM input, 48 rows = 24 KB) -------
SR_WIH = 0                      # w_ih.T, zero-padded to 8 rows
SR_WHH = SR_WIH + 8             # w_hh.T             (32 rows)
SR_BIAS = SR_WHH + H            # bias tile          (8 rows)
SMALL_ROWS = SR_BIAS + 8        # 48

# ---------------- big "post-loop" pack (pl.ANY input, 400 rows = 200 KB) ------
BR_WCAT = 0                     # W_cat              (T*H rows)
BR_W1S = BR_WCAT + T * H        # w1.T state rows    (S rows), contiguous with W_cat
BR_W2 = BR_W1S + S              # w2.T               (128 rows)
BIG_ROWS = BR_W2 + FC           # 400


def critic_kernel(old_sa_ref, state_ref, h0_ref, c0_ref, small_ref, big_hbm_ref,
                  out_ref, big_vmem, dma_sem):
    f32 = jnp.float32

    # Kick off the post-loop weight DMA immediately so it overlaps the serial
    # LSTM recurrence; it is only waited on after the loop.
    big_copy = pltpu.make_async_copy(big_hbm_ref, big_vmem, dma_sem)
    big_copy.start()

    # ---- small recurrence weights (static, 8-row-aligned slices) -------------
    w_ih = small_ref[SR_WIH:SR_WIH + 8, :]           # (8, 128); rows IN_DIM:8 zero
    w_hh = small_ref[SR_WHH:SR_WHH + H, :]           # (32, 128)
    bias_tile = small_ref[SR_BIAS:SR_BIAS + 8, :]    # (8, 128) one aligned tile
    b_lstm = bias_tile[0:1, :]                       # b_ih + b_hh
    b1 = bias_tile[1:2, :]                           # b1 + b_fc * sum_t w1_msg[t]
    b2 = bias_tile[2:3, :]
    wv_row = bias_tile[3:4, :]
    bv = bias_tile[4:5, 0:1]                         # (1, 1)

    h = h0_ref[0].astype(f32)                        # (B, H)
    c = c0_ref[0].astype(f32)                        # (B, H)

    # Input projection hoisted out of the recurrence.  x is lane-padded to K=8
    # so both operands of the matmul are full (8,128)-tile aligned; the padded
    # w_ih rows are zero so the extra K contributes nothing.
    x = old_sa_ref[...].astype(f32)                                  # (B*T, IN), row b*T+t
    x8 = jnp.concatenate([x, jnp.zeros((B * T, 8 - IN_DIM), f32)], axis=1)
    xproj = jnp.dot(x8, w_ih, preferred_element_type=f32) + b_lstm   # (B*T, 4H)

    # Per-step gate rows (b*T+t indexing -> no wrapper transpose).  These do not
    # depend on h/c, so they sit off the serial recurrence chain.
    xp = [jnp.concatenate([xproj[b * T + t:b * T + t + 1, :] for b in range(B)],
                          axis=0) for t in range(T)]                 # T x (B, 4H)

    # LSTM over time (PyTorch gate order: i, f, g, o).  T is small & static.
    h_parts = []
    for t in range(T):
        gates = xp[t] + jnp.dot(h, w_hh, preferred_element_type=f32)  # (B, 4H)
        sig = jax.nn.sigmoid(gates)                   # one EUP pass over the whole vreg
        i_g = sig[:, 0 * H:1 * H]
        f_g = sig[:, 1 * H:2 * H]
        o_g = sig[:, 3 * H:4 * H]
        g_g = jnp.tanh(gates[:, 2 * H:3 * H])
        c = f_g * c + i_g * g_g
        h = o_g * jnp.tanh(c)
        h_parts.append(h)

    # Post-loop weights are needed only from here on.
    big_copy.wait()

    # Message head + fc1-concat fold, merged into ONE matmul:
    #   fc1(cat([msg, state])) = cat(h_0..h_{T-1}, state) @ [W_cat ; w1_state] + b1_eff
    # with W_cat[t*H + k, :] = w_fc[k] * w1_msg[t, :] (b_fc folded into b1_eff).
    state = state_ref[...].astype(f32)                               # (B, S)
    feat = jnp.concatenate(h_parts + [state], axis=1)                # (B, T*H + S)
    h1 = jnp.dot(feat, big_vmem[BR_WCAT:BR_W1S + S, :],
                 preferred_element_type=f32) + b1                    # (B, 128)
    h1 = jnp.maximum(h1, 0.0)
    h2 = jnp.dot(h1, big_vmem[BR_W2:BR_W2 + FC, :],
                 preferred_element_type=f32) + b2
    h2 = jnp.maximum(h2, 0.0)

    # Value head as VPU multiply + lane reduce (avoid an N=1 MXU matmul).
    value = jnp.sum(h2 * wv_row, axis=-1, keepdims=True) + bv        # (B, 1)

    # Single lane-dense (8, 128) output tile -> one unmasked store + one DMA:
    #   rows 0:B = [h (lanes 0:H) | c (lanes H:2H) | value (lane 2H) | zeros]
    row = jnp.concatenate(
        [h, c, value, jnp.zeros((B, FC - 2 * H - 1), f32)], axis=1)  # (B, 128)
    tile = jnp.concatenate([row, jnp.zeros((8 - B, FC), f32)], axis=0)
    out_ref[...] = tile.astype(out_ref.dtype)


def pack_params(params):
    """Pack weights into (small, big) blocks (built once, reused every call)."""
    (w_ih, w_hh, b_ih, b_hh, w_fc, b_fc, w1, b1, w2, b2, wv, bv) = params
    w1t = w1.T                                       # (T+S, 128)
    w1_msg = w1t[:T]                                 # (T, 128)  message columns of fc1
    w1_state = w1t[T:]                               # (S, 128)  state columns of fc1
    w_fc_vec = w_fc.reshape(H)                       # (H,)
    # W_cat[t*H + k, :] = w_fc[k] * w1_msg[t, :]
    w_cat = (w_fc_vec[None, :, None] * w1_msg[:, None, :]).reshape(T * H, FC)
    b1_eff = b1 + b_fc[0] * jnp.sum(w1_msg, axis=0)  # fold b_fc into fc1 bias

    small = jnp.zeros((SMALL_ROWS, FC), jnp.float32)
    small = small.at[SR_WIH:SR_WIH + IN_DIM].set(w_ih.T)   # rows IN_DIM:8 stay zero
    small = small.at[SR_WHH:SR_WHH + H].set(w_hh.T)
    small = small.at[SR_BIAS + 0].set(b_ih + b_hh)
    small = small.at[SR_BIAS + 1].set(b1_eff)
    small = small.at[SR_BIAS + 2].set(b2)
    small = small.at[SR_BIAS + 3].set(wv.reshape(FC))
    small = small.at[SR_BIAS + 4, 0].set(bv[0])

    big = jnp.zeros((BIG_ROWS, FC), jnp.float32)
    big = big.at[BR_WCAT:BR_WCAT + T * H].set(w_cat)
    big = big.at[BR_W1S:BR_W1S + S].set(w1_state)
    big = big.at[BR_W2:BR_W2 + FC].set(w2.T)
    return small, big


@jax.jit
def critic_forward(state, old_s_a, h0, c0, small_pack, big_pack):
    """state: (B, S); old_s_a: (B, T, IN_DIM); h0/c0: (L, B, H)."""
    old_sa_flat = old_s_a.reshape(B * T, IN_DIM)     # free view, row b*T+t (no transpose)

    vmem = pl.BlockSpec(memory_space=pltpu.MemorySpace.VMEM)
    anyspec = pl.BlockSpec(memory_space=pl.ANY)      # big weight pack stays in HBM

    out_tile = pl.pallas_call(
        critic_kernel,
        out_shape=jax.ShapeDtypeStruct((8, FC), jnp.float32),
        in_specs=[vmem, vmem, vmem, vmem, vmem, anyspec],
        out_specs=vmem,
        scratch_shapes=[
            pltpu.VMEM((BIG_ROWS, FC), jnp.float32),   # landing buffer for big pack
            pltpu.SemaphoreType.DMA,                   # its DMA semaphore
        ],
    )(old_sa_flat, state, h0, c0, small_pack, big_pack)

    value = out_tile[:B, 2 * H:2 * H + 1]            # (B, 1)
    h_ = out_tile[:B, 0:H][None]                     # (L, B, H)
    c_ = out_tile[:B, H:2 * H][None]                 # (L, B, H)
    return value, h_, c_


def critic_reference(state, old_s_a, h0, c0, params):
    """Pure-JAX reference mirroring the PyTorch module."""
    (w_ih, w_hh, b_ih, b_hh, w_fc, b_fc, w1, b1, w2, b2, wv, bv) = params
    h, c = h0[0], c0[0]
    hs = []
    for t in range(T):
        x = old_s_a[:, t, :]
        gates = x @ w_ih.T + b_ih + h @ w_hh.T + b_hh
        i_g = jax.nn.sigmoid(gates[:, 0 * H:1 * H])
        f_g = jax.nn.sigmoid(gates[:, 1 * H:2 * H])
        g_g = jnp.tanh(gates[:, 2 * H:3 * H])
        o_g = jax.nn.sigmoid(gates[:, 3 * H:4 * H])
        c = f_g * c + i_g * g_g
        h = o_g * jnp.tanh(c)
        hs.append(h)
    lstm_out = jnp.stack(hs, axis=1)                          # (B, T, H)
    msg = (lstm_out.reshape(-1, H) @ w_fc.T + b_fc).reshape(B, T, OUT_DIM)
    m_s = jnp.concatenate([jnp.squeeze(msg, 2), state], axis=1)
    m_s = jax.nn.relu(m_s @ w1.T + b1)
    m_s = jax.nn.relu(m_s @ w2.T + b2)
    value = m_s @ wv.T + bv
    return value, h[None], c[None]


def init_params(key):
    ks = jax.random.split(key, 12)
    u = lambda k, shape, fan_in: jax.random.uniform(
        k, shape, jnp.float32, -1.0 / np.sqrt(fan_in), 1.0 / np.sqrt(fan_in))
    w_ih = u(ks[0], (4 * H, IN_DIM), H)
    w_hh = u(ks[1], (4 * H, H), H)
    b_ih = u(ks[2], (4 * H,), H)
    b_hh = u(ks[3], (4 * H,), H)
    w_fc = u(ks[4], (OUT_DIM, H), H)
    b_fc = u(ks[5], (OUT_DIM,), H)
    w1 = u(ks[6], (FC, PPO_IN), PPO_IN)
    b1 = u(ks[7], (FC,), PPO_IN)
    w2 = u(ks[8], (FC, FC), FC)
    b2 = u(ks[9], (FC,), FC)
    wv = u(ks[10], (1, FC), FC)
    bv = u(ks[11], (1,), FC)
    return (w_ih, w_hh, b_ih, b_hh, w_fc, b_fc, w1, b1, w2, b2, wv, bv)


if __name__ == "__main__":
    key = jax.random.PRNGKey(0)
    k_state, k_sa, k_h, k_c, k_p = jax.random.split(key, 5)

    state = jax.random.normal(k_state, (B, S), jnp.float32)
    old_s_a = jax.random.normal(k_sa, (B, T, IN_DIM), jnp.float32)
    h0 = jax.random.normal(k_h, (L, B, H), jnp.float32)
    c0 = jax.random.normal(k_c, (L, B, H), jnp.float32)
    params = init_params(k_p)

    # Weight packs built once, reused across calls (amortizes prep / DMA setup).
    small_pack, big_pack = jax.block_until_ready(pack_params(params))

    value, h_out, c_out = critic_forward(state, old_s_a, h0, c0, small_pack, big_pack)
    jax.block_until_ready((value, h_out, c_out))

    v_ref, h_ref, c_ref = critic_reference(state, old_s_a, h0, c0, params)
    np.testing.assert_allclose(np.asarray(value), np.asarray(v_ref), rtol=1e-3, atol=1e-3)
    np.testing.assert_allclose(np.asarray(h_out), np.asarray(h_ref), rtol=1e-3, atol=1e-3)
    np.testing.assert_allclose(np.asarray(c_out), np.asarray(c_ref), rtol=1e-3, atol=1e-3)

    print("KERNEL_OK")
</pallas_src>

<mosaic_0001>
module attributes {stable_mosaic.version = 11 : i64} {
  func.func @critic_kernel(%arg0: memref<16x4xf32, #tpu.memory_space<vmem>>, %arg1: memref<2x16xf32, #tpu.memory_space<vmem>>, %arg2: memref<1x2x32xf32, #tpu.memory_space<vmem>>, %arg3: memref<1x2x32xf32, #tpu.memory_space<vmem>>, %arg4: memref<48x128xf32, #tpu.memory_space<vmem>>, %arg5: memref<400x128xf32, #tpu.memory_space<any>>, %arg6: memref<8x128xf32, #tpu.memory_space<vmem>>, %arg7: memref<400x128xf32, #tpu.memory_space<vmem>>, %arg8: memref<!tpu.dma_semaphore, #tpu.memory_space<semaphore_mem>>) attributes {dimension_semantics = [], scalar_prefetch = 0 : i64, scratch_operands = 2 : i64, tpu.core_type = #tpu.core_type<tc>} {
    tpu.enqueue_dma source(%arg5 : memref<400x128xf32, #tpu.memory_space<any>>) target(%arg7 : memref<400x128xf32, #tpu.memory_space<vmem>>) target_semaphore(%arg8 : memref<!tpu.dma_semaphore, #tpu.memory_space<semaphore_mem>>)
    %c0 = arith.constant 0 : index
    %c0_0 = arith.constant 0 : index
    %0 = vector.load %arg4[%c0, %c0_0] : memref<48x128xf32, #tpu.memory_space<vmem>>, vector<8x128xf32>
    %c8 = arith.constant 8 : index
    %c0_1 = arith.constant 0 : index
    %1 = vector.load %arg4[%c8, %c0_1] : memref<48x128xf32, #tpu.memory_space<vmem>>, vector<32x128xf32>
    %c40 = arith.constant 40 : index
    %c0_2 = arith.constant 0 : index
    %2 = vector.load %arg4[%c40, %c0_2] : memref<48x128xf32, #tpu.memory_space<vmem>>, vector<8x128xf32>
    %3 = vector.extract_strided_slice %2 {offsets = [0, 0], sizes = [1, 128], strides = [1, 1]} : vector<8x128xf32> to vector<1x128xf32>
    %4 = vector.extract_strided_slice %2 {offsets = [1, 0], sizes = [1, 128], strides = [1, 1]} : vector<8x128xf32> to vector<1x128xf32>
    %5 = vector.extract_strided_slice %2 {offsets = [2, 0], sizes = [1, 128], strides = [1, 1]} : vector<8x128xf32> to vector<1x128xf32>
    %6 = vector.extract_strided_slice %2 {offsets = [3, 0], sizes = [1, 128], strides = [1, 1]} : vector<8x128xf32> to vector<1x128xf32>
    %7 = vector.extract_strided_slice %2 {offsets = [4, 0], sizes = [1, 1], strides = [1, 1]} : vector<8x128xf32> to vector<1x1xf32>
    %c0_3 = arith.constant 0 : index
    %c0_4 = arith.constant 0 : index
    %c0_5 = arith.constant 0 : index
    %8 = vector.load %arg2[%c0_3, %c0_4, %c0_5] : memref<1x2x32xf32, #tpu.memory_space<vmem>>, vector<1x2x32xf32>
    %9 = vector.shape_cast %8 : vector<1x2x32xf32> to vector<2x32xf32>
    %c0_6 = arith.constant 0 : index
    %c0_7 = arith.constant 0 : index
    %c0_8 = arith.constant 0 : index
    %10 = vector.load %arg3[%c0_6, %c0_7, %c0_8] : memref<1x2x32xf32, #tpu.memory_space<vmem>>, vector<1x2x32xf32>
    %11 = vector.shape_cast %10 : vector<1x2x32xf32> to vector<2x32xf32>
    %c0_9 = arith.constant 0 : index
    %c0_10 = arith.constant 0 : index
    %12 = vector.load %arg0[%c0_9, %c0_10] : memref<16x4xf32, #tpu.memory_space<vmem>>, vector<16x4xf32>
    %cst = arith.constant 0.000000e+00 : f32
    %13 = vector.broadcast %cst : f32 to vector<16x4xf32>
    %14 = tpu.concatenate %12, %13 in 1 : vector<16x4xf32>, vector<16x4xf32> -> vector<16x8xf32>
    %cst_11 = arith.constant dense<0.000000e+00> : vector<16x128xf32>
    %15 = tpu.matmul %14, %0, %cst_11 {dimension_numbers = #tpu.dot_dimension_numbers<[1], [0], [0], [1], [0, 0, 1, 1], [], []>} : vector<16x8xf32>, vector<8x128xf32>, vector<16x128xf32> -> vector<16x128xf32>
    %16 = vector.broadcast %3 : vector<1x128xf32> to vector<16x128xf32>
    %17 = arith.addf %15, %16 : vector<16x128xf32>
    %18 = vector.extract_strided_slice %17 {offsets = [0, 0], sizes = [1, 128], strides = [1, 1]} : vector<16x128xf32> to vector<1x128xf32>
    %19 = vector.extract_strided_slice %17 {offsets = [8, 0], sizes = [1, 128], strides = [1, 1]} : vector<16x128xf32> to vector<1x128xf32>
    %20 = tpu.concatenate %18, %19 in 0 : vector<1x128xf32>, vector<1x128xf32> -> vector<2x128xf32>
    %21 = vector.extract_strided_slice %17 {offsets = [1, 0], sizes = [1, 128], strides = [1, 1]} : vector<16x128xf32> to vector<1x128xf32>
    %22 = vector.extract_strided_slice %17 {offsets = [9, 0], sizes = [1, 128], strides = [1, 1]} : vector<16x128xf32> to vector<1x128xf32>
    %23 = tpu.concatenate %21, %22 in 0 : vector<1x128xf32>, vector<1x128xf32> -> vector<2x128xf32>
    %24 = vector.extract_strided_slice %17 {offsets = [2, 0], sizes = [1, 128], strides = [1, 1]} : vector<16x128xf32> to vector<1x128xf32>
    %25 = vector.extract_strided_slice %17 {offsets = [10, 0], sizes = [1, 128], strides = [1, 1]} : vector<16x128xf32> to vector<1x128xf32>
    %26 = tpu.concatenate %24, %25 in 0 : vector<1x128xf32>, vector<1x128xf32> -> vector<2x128xf32>
    %27 = vector.extract_strided_slice %17 {offsets = [3, 0], sizes = [1, 128], strides = [1, 1]} : vector<16x128xf32> to vector<1x128xf32>
    %28 = vector.extract_strided_slice %17 {offsets = [11, 0], sizes = [1, 128], strides = [1, 1]} : vector<16x128xf32> to vector<1x128xf32>
    %29 = tpu.concatenate %27, %28 in 0 : vector<1x128xf32>, vector<1x128xf32> -> vector<2x128xf32>
    %30 = vector.extract_strided_slice %17 {offsets = [4, 0], sizes = [1, 128], strides = [1, 1]} : vector<16x128xf32> to vector<1x128xf32>
    %31 = vector.extract_strided_slice %17 {offsets = [12, 0], sizes = [1, 128], strides = [1, 1]} : vector<16x128xf32> to vector<1x128xf32>
    %32 = tpu.concatenate %30, %31 in 0 : vector<1x128xf32>, vector<1x128xf32> -> vector<2x128xf32>
    %33 = vector.extract_strided_slice %17 {offsets = [5, 0], sizes = [1, 128], strides = [1, 1]} : vector<16x128xf32> to vector<1x128xf32>
    %34 = vector.extract_strided_slice %17 {offsets = [13, 0], sizes = [1, 128], strides = [1, 1]} : vector<16x128xf32> to vector<1x128xf32>
    %35 = tpu.concatenate %33, %34 in 0 : vector<1x128xf32>, vector<1x128xf32> -> vector<2x128xf32>
    %36 = vector.extract_strided_slice %17 {offsets = [6, 0], sizes = [1, 128], strides = [1, 1]} : vector<16x128xf32> to vector<1x128xf32>
    %37 = vector.extract_strided_slice %17 {offsets = [14, 0], sizes = [1, 128], strides = [1, 1]} : vector<16x128xf32> to vector<1x128xf32>
    %38 = tpu.concatenate %36, %37 in 0 : vector<1x128xf32>, vector<1x128xf32> -> vector<2x128xf32>
    %39 = vector.extract_strided_slice %17 {offsets = [7, 0], sizes = [1, 128], strides = [1, 1]} : vector<16x128xf32> to vector<1x128xf32>
    %40 = vector.extract_strided_slice %17 {offsets = [15, 0], sizes = [1, 128], strides = [1, 1]} : vector<16x128xf32> to vector<1x128xf32>
    %41 = tpu.concatenate %39, %40 in 0 : vector<1x128xf32>, vector<1x128xf32> -> vector<2x128xf32>
    %cst_12 = arith.constant dense<0.000000e+00> : vector<2x128xf32>
    %42 = tpu.matmul %9, %1, %cst_12 {dimension_numbers = #tpu.dot_dimension_numbers<[1], [0], [0], [1], [0, 0, 1, 1], [], []>} : vector<2x32xf32>, vector<32x128xf32>, vector<2x128xf32> -> vector<2x128xf32>
    %43 = arith.addf %20, %42 : vector<2x128xf32>
    %44 = arith.negf %43 : vector<2x128xf32>
    %45 = math.exp %44 : vector<2x128xf32>
    %cst_13 = arith.constant 1.000000e+00 : f32
    %46 = vector.broadcast %cst_13 : f32 to vector<2x128xf32>
    %47 = arith.addf %46, %45 : vector<2x128xf32>
    %48 = arith.divf %46, %47 : vector<2x128xf32>
    %49 = vector.extract_strided_slice %48 {offsets = [0, 0], sizes = [2, 32], strides = [1, 1]} : vector<2x128xf32> to vector<2x32xf32>
    %50 = vector.extract_strided_slice %48 {offsets = [0, 32], sizes = [2, 32], strides = [1, 1]} : vector<2x128xf32> to vector<2x32xf32>
    %51 = vector.extract_strided_slice %48 {offsets = [0, 96], sizes = [2, 32], strides = [1, 1]} : vector<2x128xf32> to vector<2x32xf32>
    %52 = vector.extract_strided_slice %43 {offsets = [0, 64], sizes = [2, 32], strides = [1, 1]} : vector<2x128xf32> to vector<2x32xf32>
    %53 = math.tanh %52 : vector<2x32xf32>
    %54 = arith.mulf %50, %11 : vector<2x32xf32>
    %55 = arith.mulf %49, %53 : vector<2x32xf32>
    %56 = arith.addf %54, %55 : vector<2x32xf32>
    %57 = math.tanh %56 : vector<2x32xf32>
    %58 = arith.mulf %51, %57 : vector<2x32xf32>
    %cst_14 = arith.constant dense<0.000000e+00> : vector<2x128xf32>
    %59 = tpu.matmul %58, %1, %cst_14 {dimension_numbers = #tpu.dot_dimension_numbers<[1], [0], [0], [1], [0, 0, 1, 1], [], []>} : vector<2x32xf32>, vector<32x128xf32>, vector<2x128xf32> -> vector<2x128xf32>
    %60 = arith.addf %23, %59 : vector<2x128xf32>
    %61 = arith.negf %60 : vector<2x128xf32>
    %62 = math.exp %61 : vector<2x128xf32>
    %cst_15 = arith.constant 1.000000e+00 : f32
    %63 = vector.broadcast %cst_15 : f32 to vector<2x128xf32>
    %64 = arith.addf %63, %62 : vector<2x128xf32>
    %65 = arith.divf %63, %64 : vector<2x128xf32>
    %66 = vector.extract_strided_slice %65 {offsets = [0, 0], sizes = [2, 32], strides = [1, 1]} : vector<2x128xf32> to vector<2x32xf32>
    %67 = vector.extract_strided_slice %65 {offsets = [0, 32], sizes = [2, 32], strides = [1, 1]} : vector<2x128xf32> to vector<2x32xf32>
    %68 = vector.extract_strided_slice %65 {offsets = [0, 96], sizes = [2, 32], strides = [1, 1]} : vector<2x128xf32> to vector<2x32xf32>
    %69 = vector.extract_strided_slice %60 {offsets = [0, 64], sizes = [2, 32], strides = [1, 1]} : vector<2x128xf32> to vector<2x32xf32>
    %70 = math.tanh %69 : vector<2x32xf32>
    %71 = arith.mulf %67, %56 : vector<2x32xf32>
    %72 = arith.mulf %66, %70 : vector<2x32xf32>
    %73 = arith.addf %71, %72 : vector<2x32xf32>
    %74 = math.tanh %73 : vector<2x32xf32>
    %75 = arith.mulf %68, %74 : vector<2x32xf32>
    %cst_16 = arith.constant dense<0.000000e+00> : vector<2x128xf32>
    %76 = tpu.matmul %75, %1, %cst_16 {dimension_numbers = #tpu.dot_dimension_numbers<[1], [0], [0], [1], [0, 0, 1, 1], [], []>} : vector<2x32xf32>, vector<32x128xf32>, vector<2x128xf32> -> vector<2x128xf32>
    %77 = arith.addf %26, %76 : vector<2x128xf32>
    %78 = arith.negf %77 : vector<2x128xf32>
    %79 = math.exp %78 : vector<2x128xf32>
    %cst_17 = arith.constant 1.000000e+00 : f32
    %80 = vector.broadcast %cst_17 : f32 to vector<2x128xf32>
    %81 = arith.addf %80, %79 : vector<2x128xf32>
    %82 = arith.divf %80, %81 : vector<2x128xf32>
    %83 = vector.extract_strided_slice %82 {offsets = [0, 0], sizes = [2, 32], strides = [1, 1]} : vector<2x128xf32> to vector<2x32xf32>
    %84 = vector.extract_strided_slice %82 {offsets = [0, 32], sizes = [2, 32], strides = [1, 1]} : vector<2x128xf32> to vector<2x32xf32>
    %85 = vector.extract_strided_slice %82 {offsets = [0, 96], sizes = [2, 32], strides = [1, 1]} : vector<2x128xf32> to vector<2x32xf32>
    %86 = vector.extract_strided_slice %77 {offsets = [0, 64], sizes = [2, 32], strides = [1, 1]} : vector<2x128xf32> to vector<2x32xf32>
    %87 = math.tanh %86 : vector<2x32xf32>
    %88 = arith.mulf %84, %73 : vector<2x32xf32>
    %89 = arith.mulf %83, %87 : vector<2x32xf32>
    %90 = arith.addf %88, %89 : vector<2x32xf32>
    %91 = math.tanh %90 : vector<2x32xf32>
    %92 = arith.mulf %85, %91 : vector<2x32xf32>
    %cst_18 = arith.constant dense<0.000000e+00> : vector<2x128xf32>
    %93 = tpu.matmul %92, %1, %cst_18 {dimension_numbers = #tpu.dot_dimension_numbers<[1], [0], [0], [1], [0, 0, 1, 1], [], []>} : vector<2x32xf32>, vector<32x128xf32>, vector<2x128xf32> -> vector<2x128xf32>
    %94 = arith.addf %29, %93 : vector<2x128xf32>
    %95 = arith.negf %94 : vector<2x128xf32>
    %96 = math.exp %95 : vector<2x128xf32>
    %cst_19 = arith.constant 1.000000e+00 : f32
    %97 = vector.broadcast %cst_19 : f32 to vector<2x128xf32>
    %98 = arith.addf %97, %96 : vector<2x128xf32>
    %99 = arith.divf %97, %98 : vector<2x128xf32>
    %100 = vector.extract_strided_slice %99 {offsets = [0, 0], sizes = [2, 32], strides = [1, 1]} : vector<2x128xf32> to vector<2x32xf32>
    %101 = vector.extract_strided_slice %99 {offsets = [0, 32], sizes = [2, 32], strides = [1, 1]} : vector<2x128xf32> to vector<2x32xf32>
    %102 = vector.extract_strided_slice %99 {offsets = [0, 96], sizes = [2, 32], strides = [1, 1]} : vector<2x128xf32> to vector<2x32xf32>
    %103 = vector.extract_strided_slice %94 {offsets = [0, 64], sizes = [2, 32], strides = [1, 1]} : vector<2x128xf32> to vector<2x32xf32>
    %104 = math.tanh %103 : vector<2x32xf32>
    %105 = arith.mulf %101, %90 : vector<2x32xf32>
    %106 = arith.mulf %100, %104 : vector<2x32xf32>
    %107 = arith.addf %105, %106 : vector<2x32xf32>
    %108 = math.tanh %107 : vector<2x32xf32>
    %109 = arith.mulf %102, %108 : vector<2x32xf32>
    %cst_20 = arith.constant dense<0.000000e+00> : vector<2x128xf32>
    %110 = tpu.matmul %109, %1, %cst_20 {dimension_numbers = #tpu.dot_dimension_numbers<[1], [0], [0], [1], [0, 0, 1, 1], [], []>} : vector<2x32xf32>, vector<32x128xf32>, vector<2x128xf32> -> vector<2x128xf32>
    %111 = arith.addf %32, %110 : vector<2x128xf32>
    %112 = arith.negf %111 : vector<2x128xf32>
    %113 = math.exp %112 : vector<2x128xf32>
    %cst_21 = arith.constant 1.000000e+00 : f32
    %114 = vector.broadcast %cst_21 : f32 to vector<2x128xf32>
    %115 = arith.addf %114, %113 : vector<2x128xf32>
    %116 = arith.divf %114, %115 : vector<2x128xf32>
    %117 = vector.extract_strided_slice %116 {offsets = [0, 0], sizes = [2, 32], strides = [1, 1]} : vector<2x128xf32> to vector<2x32xf32>
    %118 = vector.extract_strided_slice %116 {offsets = [0, 32], sizes = [2, 32], strides = [1, 1]} : vector<2x128xf32> to vector<2x32xf32>
    %119 = vector.extract_strided_slice %116 {offsets = [0, 96], sizes = [2, 32], strides = [1, 1]} : vector<2x128xf32> to vector<2x32xf32>
    %120 = vector.extract_strided_slice %111 {offsets = [0, 64], sizes = [2, 32], strides = [1, 1]} : vector<2x128xf32> to vector<2x32xf32>
    %121 = math.tanh %120 : vector<2x32xf32>
    %122 = arith.mulf %118, %107 : vector<2x32xf32>
    %123 = arith.mulf %117, %121 : vector<2x32xf32>
    %124 = arith.addf %122, %123 : vector<2x32xf32>
    %125 = math.tanh %124 : vector<2x32xf32>
    %126 = arith.mulf %119, %125 : vector<2x32xf32>
    %cst_22 = arith.constant dense<0.000000e+00> : vector<2x128xf32>
    %127 = tpu.matmul %126, %1, %cst_22 {dimension_numbers = #tpu.dot_dimension_numbers<[1], [0], [0], [1], [0, 0, 1, 1], [], []>} : vector<2x32xf32>, vector<32x128xf32>, vector<2x128xf32> -> vector<2x128xf32>
    %128 = arith.addf %35, %127 : vector<2x128xf32>
    %129 = arith.negf %128 : vector<2x128xf32>
    %130 = math.exp %129 : vector<2x128xf32>
    %cst_23 = arith.constant 1.000000e+00 : f32
    %131 = vector.broadcast %cst_23 : f32 to vector<2x128xf32>
    %132 = arith.addf %131, %130 : vector<2x128xf32>
    %133 = arith.divf %131, %132 : vector<2x128xf32>
    %134 = vector.extract_strided_slice %133 {offsets = [0, 0], sizes = [2, 32], strides = [1, 1]} : vector<2x128xf32> to vector<2x32xf32>
    %135 = vector.extract_strided_slice %133 {offsets = [0, 32], sizes = [2, 32], strides = [1, 1]} : vector<2x128xf32> to vector<2x32xf32>
    %136 = vector.extract_strided_slice %133 {offsets = [0, 96], sizes = [2, 32], strides = [1, 1]} : vector<2x128xf32> to vector<2x32xf32>
    %137 = vector.extract_strided_slice %128 {offsets = [0, 64], sizes = [2, 32], strides = [1, 1]} : vector<2x128xf32> to vector<2x32xf32>
    %138 = math.tanh %137 : vector<2x32xf32>
    %139 = arith.mulf %135, %124 : vector<2x32xf32>
    %140 = arith.mulf %134, %138 : vector<2x32xf32>
    %141 = arith.addf %139, %140 : vector<2x32xf32>
    %142 = math.tanh %141 : vector<2x32xf32>
    %143 = arith.mulf %136, %142 : vector<2x32xf32>
    %cst_24 = arith.constant dense<0.000000e+00> : vector<2x128xf32>
    %144 = tpu.matmul %143, %1, %cst_24 {dimension_numbers = #tpu.dot_dimension_numbers<[1], [0], [0], [1], [0, 0, 1, 1], [], []>} : vector<2x32xf32>, vector<32x128xf32>, vector<2x128xf32> -> vector<2x128xf32>
    %145 = arith.addf %38, %144 : vector<2x128xf32>
    %146 = arith.negf %145 : vector<2x128xf32>
    %147 = math.exp %146 : vector<2x128xf32>
    %cst_25 = arith.constant 1.000000e+00 : f32
    %148 = vector.broadcast %cst_25 : f32 to vector<2x128xf32>
    %149 = arith.addf %148, %147 : vector<2x128xf32>
    %150 = arith.divf %148, %149 : vector<2x128xf32>
    %151 = vector.extract_strided_slice %150 {offsets = [0, 0], sizes = [2, 32], strides = [1, 1]} : vector<2x128xf32> to vector<2x32xf32>
    %152 = vector.extract_strided_slice %150 {offsets = [0, 32], sizes = [2, 32], strides = [1, 1]} : vector<2x128xf32> to vector<2x32xf32>
    %153 = vector.extract_strided_slice %150 {offsets = [0, 96], sizes = [2, 32], strides = [1, 1]} : vector<2x128xf32> to vector<2x32xf32>
    %154 = vector.extract_strided_slice %145 {offsets = [0, 64], sizes = [2, 32], strides = [1, 1]} : vector<2x128xf32> to vector<2x32xf32>
    %155 = math.tanh %154 : vector<2x32xf32>
    %156 = arith.mulf %152, %141 : vector<2x32xf32>
    %157 = arith.mulf %151, %155 : vector<2x32xf32>
    %158 = arith.addf %156, %157 : vector<2x32xf32>
    %159 = math.tanh %158 : vector<2x32xf32>
    %160 = arith.mulf %153, %159 : vector<2x32xf32>
    %cst_26 = arith.constant dense<0.000000e+00> : vector<2x128xf32>
    %161 = tpu.matmul %160, %1, %cst_26 {dimension_numbers = #tpu.dot_dimension_numbers<[1], [0], [0], [1], [0, 0, 1, 1], [], []>} : vector<2x32xf32>, vector<32x128xf32>, vector<2x128xf32> -> vector<2x128xf32>
    %162 = arith.addf %41, %161 : vector<2x128xf32>
    %163 = arith.negf %162 : vector<2x128xf32>
    %164 = math.exp %163 : vector<2x128xf32>
    %cst_27 = arith.constant 1.000000e+00 : f32
    %165 = vector.broadcast %cst_27 : f32 to vector<2x128xf32>
    %166 = arith.addf %165, %164 : vector<2x128xf32>
    %167 = arith.divf %165, %166 : vector<2x128xf32>
    %168 = vector.extract_strided_slice %167 {offsets = [0, 0], sizes = [2, 32], strides = [1, 1]} : vector<2x128xf32> to vector<2x32xf32>
    %169 = vector.extract_strided_slice %167 {offsets = [0, 32], sizes = [2, 32], strides = [1, 1]} : vector<2x128xf32> to vector<2x32xf32>
    %170 = vector.extract_strided_slice %167 {offsets = [0, 96], sizes = [2, 32], strides = [1, 1]} : vector<2x128xf32> to vector<2x32xf32>
    %171 = vector.extract_strided_slice %162 {offsets = [0, 64], sizes = [2, 32], strides = [1, 1]} : vector<2x128xf32> to vector<2x32xf32>
    %172 = math.tanh %171 : vector<2x32xf32>
    %173 = arith.mulf %169, %158 : vector<2x32xf32>
    %174 = arith.mulf %168, %172 : vector<2x32xf32>
    %175 = arith.addf %173, %174 : vector<2x32xf32>
    %176 = math.tanh %175 : vector<2x32xf32>
    %177 = arith.mulf %170, %176 : vector<2x32xf32>
    tpu.wait_dma2 semaphore(%arg8 : memref<!tpu.dma_semaphore, #tpu.memory_space<semaphore_mem>>) src(%arg5 : memref<400x128xf32, #tpu.memory_space<any>>) dst(%arg7 : memref<400x128xf32, #tpu.memory_space<vmem>>)
    %c0_28 = arith.constant 0 : index
    %c0_29 = arith.constant 0 : index
    %178 = vector.load %arg1[%c0_28, %c0_29] : memref<2x16xf32, #tpu.memory_space<vmem>>, vector<2x16xf32>
    %179 = tpu.concatenate %58, %75, %92, %109, %126, %143, %160, %177, %178 in 1 : vector<2x32xf32>, vector<2x32xf32>, vector<2x32xf32>, vector<2x32xf32>, vector<2x32xf32>, vector<2x32xf32>, vector<2x32xf32>, vector<2x32xf32>, vector<2x16xf32> -> vector<2x272xf32>
    %c0_30 = arith.constant 0 : index
    %c0_31 = arith.constant 0 : index
    %180 = vector.load %arg7[%c0_30, %c0_31] : memref<400x128xf32, #tpu.memory_space<vmem>>, vector<272x128xf32>
    %cst_32 = arith.constant dense<0.000000e+00> : vector<2x128xf32>
    %181 = tpu.matmul %179, %180, %cst_32 {dimension_numbers = #tpu.dot_dimension_numbers<[1], [0], [0], [1], [0, 0, 1, 1], [], []>} : vector<2x272xf32>, vector<272x128xf32>, vector<2x128xf32> -> vector<2x128xf32>
    %182 = vector.broadcast %4 : vector<1x128xf32> to vector<2x128xf32>
    %183 = arith.addf %181, %182 : vector<2x128xf32>
    %cst_33 = arith.constant 0.000000e+00 : f32
    %184 = vector.broadcast %cst_33 : f32 to vector<2x128xf32>
    %185 = arith.maximumf %183, %184 : vector<2x128xf32>
    %c272 = arith.constant 272 : index
    %c0_34 = arith.constant 0 : index
    %186 = vector.load %arg7[%c272, %c0_34] : memref<400x128xf32, #tpu.memory_space<vmem>>, vector<128x128xf32>
    %cst_35 = arith.constant dense<0.000000e+00> : vector<2x128xf32>
    %187 = tpu.matmul %185, %186, %cst_35 {dimension_numbers = #tpu.dot_dimension_numbers<[1], [0], [0], [1], [0, 0, 1, 1], [], []>} : vector<2x128xf32>, vector<128x128xf32>, vector<2x128xf32> -> vector<2x128xf32>
    %188 = vector.broadcast %5 : vector<1x128xf32> to vector<2x128xf32>
    %189 = arith.addf %187, %188 : vector<2x128xf32>
    %cst_36 = arith.constant 0.000000e+00 : f32
    %190 = vector.broadcast %cst_36 : f32 to vector<2x128xf32>
    %191 = arith.maximumf %189, %190 : vector<2x128xf32>
    %192 = vector.broadcast %6 : vector<1x128xf32> to vector<2x128xf32>
    %193 = arith.mulf %191, %192 : vector<2x128xf32>
    %cst_37 = arith.constant dense<0.000000e+00> : vector<2xf32>
    %194 = vector.multi_reduction <add>, %193, %cst_37 [1] : vector<2x128xf32> to vector<2xf32>
    %195 = vector.shape_cast %194 : vector<2xf32> to vector<2x1xf32>
    %196 = vector.broadcast %7 : vector<1x1xf32> to vector<2x1xf32>
    %197 = arith.addf %195, %196 : vector<2x1xf32>
    %cst_38 = arith.constant 0.000000e+00 : f32
    %198 = vector.broadcast %cst_38 : f32 to vector<2x63xf32>
    %199 = tpu.concatenate %177, %175, %197, %198 in 1 : vector<2x32xf32>, vector<2x32xf32>, vector<2x1xf32>, vector<2x63xf32> -> vector<2x128xf32>
    %cst_39 = arith.constant 0.000000e+00 : f32
    %200 = vector.broadcast %cst_39 : f32 to vector<6x128xf32>
    %201 = tpu.concatenate %199, %200 in 0 : vector<2x128xf32>, vector<6x128xf32> -> vector<8x128xf32>
    %c0_40 = arith.constant 0 : index
    %c0_41 = arith.constant 0 : index
    %202 = vector.load %arg6[%c0_40, %c0_41] : memref<8x128xf32, #tpu.memory_space<vmem>>, vector<8x128xf32>
    tpu.vector_store %arg6[%c0_40, %c0_41], %201 {strides = array<i32>} : memref<8x128xf32, #tpu.memory_space<vmem>>, vector<8x128xf32>,
    return
  }
}

</mosaic_0001>

<llo_original>
// kernel: critic_forward.1
$region0: #{critic_forward.1}
  #allocation0 [shape = 'u32[]', space=smem, size = 0x4, offset = 0x4, fixed_abs, tag = 'smem constant byte address 0x4 - core index']
  #allocation1 [shape = 'u32[144,128]{1,0:T(1,128)}', space=vmem, size = 0x12000, scoped, tag = 'internal scratch']
  #allocation2 [shape = 'f32[400,128]{1,0:T(8,128)}', space=vmem, size = 0x32000, scoped, tag = 'scratch operand']
  #allocation3 [shape = 's32[1]{0}', space=sflag, size = 0x4, scoped, tag = 'scratch operand']
  #allocation6 [shape = 's32[]', space=sflag, size = 0x4, offset = 0, fixed_abs, tag = 'sflag constant byte address 0x0 - dummy sync flag']
  #allocation7 [shape = 's32[]', space=sflag, size = 0x4, offset = 0, fixed_abs, tag = 'sflag constant byte address 0x0 - dummy sync flag']
  #allocation8 [shape = 'u32[]', space=smem, size = 0x4, offset = 0x44, fixed_abs, tag = 'smem constant byte address 0x44 - assertion arg 0']
  #allocation9 [shape = 'u32[]', space=smem, size = 0x4, offset = 0x48, fixed_abs, tag = 'smem constant byte address 0x48 - assertion arg 1']
  %s0 = inlined_call_operand.vmem [shape: f32[16,4], index: 0, kind: input, shape index: {}]
  %s1 = inlined_call_operand.vmem [shape: f32[2,16], index: 1, kind: input, shape index: {}]
  %s2 = inlined_call_operand.vmem [shape: f32[1,2,32], index: 2, kind: input, shape index: {}]
  %s3 = inlined_call_operand.vmem [shape: f32[1,2,32], index: 3, kind: input, shape index: {}]
  %s4 = inlined_call_operand.hbm [shape: f32[48,128], index: 4, kind: input, shape index: {}]
  %s5 = inlined_call_operand.hbm [shape: f32[400,128], index: 5, kind: input, shape index: {}]
  %s6 = inlined_call_operand.vmem [shape: f32[8,128], index: 6, kind: output, shape index: {}]
  %s7 = sld [smem:[#allocation0]]
  $region38: #{critic_forward.1} parent=0
    _
  %s9 = ssub.s32 1, %s7
  %s10 = scalar_select 0, %s9, %s7
  $region1: #{critic_forward.1} parent=0
    #allocation4 [shape = 'u8[24576]{0}', space=vmem, size = 0x6000, scoped, tag = 'input window, operand 4, single buffered']
    #allocation5 [shape = 's32[1]{0}', space=sflag, size = 0x4, scoped, tag = 'scoped memory for critic_forward.1']
    %11 = vsyncpa [#allocation5], 0
    // Predicated region
    $region2: #{critic_forward.1} parent=1 // pred_check
      _
    $region3: #{critic_forward.1} parent=1 // pred_check_branch
      %13 = sbr.rel (0) target = $region5
    $region4: #{critic_forward.1} parent=1 // pred_region
      _
    $region5: #{critic_forward.1} parent=1 // pred_fallthru
      _
    // Predicated region
    $region6: #{critic_forward.1} parent=1 // pred_check
      _
    $region7: #{critic_forward.1} parent=1 // pred_check_branch
      %15 = sbr.rel (0) target = $region9
    $region8: #{critic_forward.1} parent=1 // pred_region
      _
    $region9: #{critic_forward.1} parent=1 // pred_fallthru
      _
    // Predicated region
    $region10: #{critic_forward.1} parent=1 // pred_check
      _
    $region11: #{critic_forward.1} parent=1 // pred_check_branch
      %17 = sbr.rel (0) target = $region13
    $region12: #{critic_forward.1} parent=1 // pred_region
      _
    $region13: #{critic_forward.1} parent=1 // pred_fallthru
      _
    // Predicated region
    $region14: #{critic_forward.1} parent=1 // pred_check
      _
    $region15: #{critic_forward.1} parent=1 // pred_check_branch
      %19 = sbr.rel (0) target = $region17
    $region16: #{critic_forward.1} parent=1 // pred_region
      _
    $region17: #{critic_forward.1} parent=1 // pred_fallthru
      _
    // Predicated region
    $region18: #{critic_forward.1} parent=1 // pred_check
      _
    $region19: #{critic_forward.1} parent=1 // pred_check_branch
      %21 = sbr.rel (0) target = $region21
    $region20: #{critic_forward.1} parent=1 // pred_region
      %s23 = ssub.s32 768, 768
      %24 = vsyncadd [#allocation5], %s23
      %s25 = sshll.u32 [#allocation4], 4
      %s26 = int_to_ptr.vmem [resolvable:$true] %s25
      %31 = dma.hbm_to_vmem [thread:$0]  %s4, 768, %s26, [#allocation5], 128, 128, 8
    $region21: #{critic_forward.1} parent=1 // pred_fallthru
      _
    // Predicated region
    $region22: #{critic_forward.1} parent=1 // pred_check
      _
    $region23: #{critic_forward.1} parent=1 // pred_check_branch
      %33 = sbr.rel (0) target = $region25
    $region24: #{critic_forward.1} parent=1 // pred_region
      %34 = dma.done [#allocation5], 768
    $region25: #{critic_forward.1} parent=1 // pred_fallthru
      _
    // Predicated region
    $region26: #{critic_forward.1} parent=1 // pred_check
      _
    $region27: #{critic_forward.1} parent=1 // pred_check_branch
      %36 = sbr.rel target = $region29
    $region28: #{critic_forward.1} parent=1 // pred_region
      %37 = sst [smem:[#allocation8]] [#allocation7]
      %38 = sst [smem:[#allocation9]] [#allocation6]
    $region29: #{critic_forward.1} parent=1 // pred_fallthru
      _
    %40 = shalt.err (0)
    %s42 = sshll.u32 [#allocation2], 4
    %s43 = int_to_ptr.vmem [resolvable:$true] %s42
    %45 = dma.hbm_to_vmem [thread:$0]  %s5, 6400, %s43, [#allocation3]
    %v46 = vld [vmem:[#allocation4] sm:$0xff]
    %v47 = vld [vmem:[#allocation4 + $0x8] sm:$0xff]
    %v48 = vld [vmem:[#allocation4 + $0x10] sm:$0xff]
    %v49 = vld [vmem:[#allocation4 + $0x18] sm:$0xff]
    %v50 = vld [vmem:[#allocation4 + $0x20] sm:$0xff]
    %v51 = vld [vmem:[#allocation4 + $0x28] sm:$0xff]
    %v52 = vld [vmem:[%s2] sm:$0x3]
    %v53 = vld [vmem:[%s3] sm:$0x3]
    %v54 = vld [vmem:[%s0] sm:$0xff]
    %v55 = vld [vmem:[%s0 + $0x8] sm:$0xff]
    %vm56 = vcmask 31744
    %v57 = vsel %vm56, %v54, 0.0
    %v58 = vsel %vm56, %v55, 0.0
    %v59 = vlaneseq
    %v60 = vshrl.u32 %v59, 7
    %v61 = vsub.s32 0, %v60
    %v62 = vrot.slane %v51, %v61
    %vm63 = vcmask 64512
    %v65 = vsel %vm63, %v57, 0
    %v68 = vsel %vm63, %v58, 0
    %70 = vmatprep.subr.mxu0 0.0
    %71 = vmatpush1.msra.mxu0 %v46
    %72 = vmatprep.subr.mxu0 0.0
    %73 = vmatpush1.msra.mxu0 0.0
    %74 = vmatprep.subr.mxu0 0.0
    %75 = vmatpush1.msra.mxu0 0.0
    %76 = vmatprep.subr.mxu0 0.0
    %77 = vmatpush1.msra.mxu0 0.0
    %78 = vmatprep.subr.mxu0 0.0
    %79 = vmatpush1.msra.mxu0 0.0
    %80 = vmatprep.subr.mxu0 0.0
    %81 = vmatpush1.msra.mxu0 0.0
    %82 = vmatprep.subr.mxu0 0.0
    %83 = vmatpush1.msra.mxu0 0.0
    %84 = vmatprep.subr.mxu0 0.0
    %85 = vmatpush1.msra.mxu0 0.0
    %86 = vmatprep.subr.mxu0 0.0
    %87 = vmatpush1.msra.mxu0 0.0
    %88 = vmatprep.subr.mxu0 0.0
    %89 = vmatpush1.msra.mxu0 0.0
    %90 = vmatprep.subr.mxu0 0.0
    %91 = vmatpush1.msra.mxu0 0.0
    %92 = vmatprep.subr.mxu0 0.0
    %93 = vmatpush1.msra.mxu0 0.0
    %94 = vmatprep.subr.mxu0 0.0
    %95 = vmatpush1.msra.mxu0 0.0
    %96 = vmatprep.subr.mxu0 0.0
    %97 = vmatpush1.msra.mxu0 0.0
    %98 = vmatprep.subr.mxu0 0.0
    %99 = vmatpush1.msra.mxu0 0.0
    %100 = vmatprep.subr.mxu0 0.0
    %101 = vmatpush1.msra.mxu0 0.0
    %102 = vmatprep.subr.mxu0 0.0
    %103 = vmatpush1.msra.mxu0 0.0
    %104 = vmatprep.subr.mxu0 0.0
    %105 = vmatpush1.msra.mxu0 0.0
    %106 = vmatprep.subr.mxu0 0.0
    %107 = vmatpush1.msra.mxu0 0.0
    %108 = vmatprep.subr.mxu0 0.0
    %109 = vmatpush1.msra.mxu0 0.0
    %110 = vmatprep.subr.mxu0 0.0
    %111 = vmatpush1.msra.mxu0 0.0
    %112 = vmatprep.subr.mxu0 0.0
    %113 = vmatpush1.msra.mxu0 0.0
    %114 = vmatprep.subr.mxu0 0.0
    %115 = vmatpush1.msra.mxu0 0.0
    %116 = vmatprep.subr.mxu0 0.0
    %117 = vmatpush1.msra.mxu0 0.0
    %118 = vmatprep.subr.mxu0 0.0
    %119 = vmatpush1.msra.mxu0 0.0
    %120 = vmatprep.subr.mxu0 0.0
    %121 = vmatpush1.msra.mxu0 0.0
    %122 = vmatprep.subr.mxu0 0.0
    %123 = vmatpush1.msra.mxu0 0.0
    %124 = vmatprep.subr.mxu0 0.0
    %125 = vmatpush1.msra.mxu0 0.0
    %126 = vmatprep.subr.mxu0 0.0
    %127 = vmatpush1.msra.mxu0 0.0
    %128 = vmatprep.subr.mxu0 0.0
    %129 = vmatpush1.msra.mxu0 0.0
    %130 = vmatprep.subr.mxu0 0.0
    %131 = vmatpush1.msra.mxu0 0.0
    %132 = vmatprep.subr.mxu0 0.0
    %133 = vmatpush1.msra.mxu0 0.0
    %134 = vmatprep.mubr.f32.mxu0 0.0
    %135 = vmatmul.mubr.f32.gmra.mrb[0].mxu0 %v65
    %v136 = vpop.f32.mrb[0].mxu0
    %v137 = vadd.f32 %v62, %v136
    %v138 = vpop.f32.mrb[0].mxu0
    %139 = vmatprep.mubr.f32.mxu0 0.0
    %140 = vmatmul.mubr.f32.gmra.mrb[0].mxu0 %v68
    %v141 = vpop.f32.mrb[0].mxu0
    %v142 = vadd.f32 %v62, %v141
    %v143 = vpop.f32.mrb[0].mxu0
    %144 = vdwg.mxu0
    %v146 = vrot.slane %v142, 7
    %vm148 = vcmask 1040384
    %v149 = vsel %vm148, %v137, %v146
    %v151 = vrot.slane %v137, 1
    %v153 = vsel %vm148, %v151, %v142
    %v154 = vrot.slane %v137, 2
    %v156 = vrot.slane %v142, 1
    %v158 = vsel %vm148, %v154, %v156
    %v159 = vrot.slane %v137, 3
    %v161 = vrot.slane %v142, 2
    %v163 = vsel %vm148, %v159, %v161
    %v164 = vrot.slane %v137, 4
    %v166 = vrot.slane %v142, 3
    %v168 = vsel %vm148, %v164, %v166
    %v169 = vrot.slane %v137, 5
    %v171 = vrot.slane %v142, 4
    %v173 = vsel %vm148, %v169, %v171
    %v174 = vrot.slane %v137, 6
    %v176 = vrot.slane %v142, 5
    %v178 = vsel %vm148, %v174, %v176
    %v179 = vrot.slane %v137, 7
    %v181 = vrot.slane %v142, 6
    %v183 = vsel %vm148, %v179, %v181
    %vm184 = vcmask 261120
    %v186 = vsel %vm184, %v52, 0
    %188 = vmatprep.subr.mxu0 0.0
    %189 = vmatpush1.msra.mxu0 %v47
    %190 = vmatprep.subr.mxu0 0.0
    %191 = vmatpush1.msra.mxu0 %v48
    %192 = vmatprep.subr.mxu0 0.0
    %193 = vmatpush1.msra.mxu0 %v49
    %194 = vmatprep.subr.mxu0 0.0
    %195 = vmatpush1.msra.mxu0 %v50
    %196 = vmatprep.subr.mxu0 0.0
    %197 = vmatpush1.msra.mxu0 0.0
    %198 = vmatprep.subr.mxu0 0.0
    %199 = vmatpush1.msra.mxu0 0.0
    %200 = vmatprep.subr.mxu0 0.0
    %201 = vmatpush1.msra.mxu0 0.0
    %202 = vmatprep.subr.mxu0 0.0
    %203 = vmatpush1.msra.mxu0 0.0
    %204 = vmatprep.subr.mxu0 0.0
    %205 = vmatpush1.msra.mxu0 0.0
    %206 = vmatprep.subr.mxu0 0.0
    %207 = vmatpush1.msra.mxu0 0.0
    %208 = vmatprep.subr.mxu0 0.0
    %209 = vmatpush1.msra.mxu0 0.0
    %210 = vmatprep.subr.mxu0 0.0
    %211 = vmatpush1.msra.mxu0 0.0
    %212 = vmatprep.subr.mxu0 0.0
    %213 = vmatpush1.msra.mxu0 0.0
    %214 = vmatprep.subr.mxu0 0.0
    %215 = vmatpush1.msra.mxu0 0.0
    %216 = vmatprep.subr.mxu0 0.0
    %217 = vmatpush1.msra.mxu0 0.0
    %218 = vmatprep.subr.mxu0 0.0
    %219 = vmatpush1.msra.mxu0 0.0
    %220 = vmatprep.subr.mxu0 0.0
    %221 = vmatpush1.msra.mxu0 0.0
    %222 = vmatprep.subr.mxu0 0.0
    %223 = vmatpush1.msra.mxu0 0.0
    %224 = vmatprep.subr.mxu0 0.0
    %225 = vmatpush1.msra.mxu0 0.0
    %226 = vmatprep.subr.mxu0 0.0
    %227 = vmatpush1.msra.mxu0 0.0
    %228 = vmatprep.subr.mxu0 0.0
    %229 = vmatpush1.msra.mxu0 0.0
    %230 = vmatprep.subr.mxu0 0.0
    %231 = vmatpush1.msra.mxu0 0.0
    %232 = vmatprep.subr.mxu0 0.0
    %233 = vmatpush1.msra.mxu0 0.0
    %234 = vmatprep.subr.mxu0 0.0
    %235 = vmatpush1.msra.mxu0 0.0
    %236 = vmatprep.subr.mxu0 0.0
    %237 = vmatpush1.msra.mxu0 0.0
    %238 = vmatprep.subr.mxu0 0.0
    %239 = vmatpush1.msra.mxu0 0.0
    %240 = vmatprep.subr.mxu0 0.0
    %241 = vmatpush1.msra.mxu0 0.0
    %242 = vmatprep.subr.mxu0 0.0
    %243 = vmatpush1.msra.mxu0 0.0
    %244 = vmatprep.subr.mxu0 0.0
    %245 = vmatpush1.msra.mxu0 0.0
    %246 = vmatprep.subr.mxu0 0.0
    %247 = vmatpush1.msra.mxu0 0.0
    %248 = vmatprep.subr.mxu0 0.0
    %249 = vmatpush1.msra.mxu0 0.0
    %250 = vmatprep.subr.mxu0 0.0
    %251 = vmatpush1.msra.mxu0 0.0
    %252 = vmatprep.mubr.f32.mxu0 0.0
    %253 = vmatmul.mubr.f32.gmra.mrb[0].mxu0 %v186
    %v254 = vpop.f32.mrb[0].mxu0
    %v255 = vadd.f32 0.0, %v254
    %v256 = vpop.f32.mrb[0].mxu0
    %257 = vdwg.mxu0
    %v258 = vadd.f32 %v149, %v255
    %v259 = vxor.u32 %v258, 2147483648
    %v260 = vmul.f32 %v259, 1.442695
    %v261 = vpow.pop %v260
    %v262 = vadd.f32 %v261, 1.0
    %v263 = vrcp.pop %v262
    %v264 = vmul.f32 1.0, %v263
    %v265 = vtanh.pop %v258
    %267 = vrot.lane.b32.xlu0 %v53, 32
    %v268 = vpop.permute.xlu0 %267
    %v270 = vmul.f32 %v264, %v268
    %272 = vrot.lane.b32.xlu0 %v265, 64
    %v273 = vpop.permute.xlu0 %272
    %v275 = vmul.f32 %v264, %v273
    %277 = vrot.lane.b32.xlu0 %v275, 32
    %v278 = vpop.permute.xlu0 %277
    %v280 = vadd.f32 %v270, %v278
    %v281 = vtanh.pop %v280
    %283 = vrot.lane.b32.xlu0 %v281, 64
    %v284 = vpop.permute.xlu0 %283
    %v286 = vmul.f32 %v264, %v284
    %288 = vrot.lane.b32.xlu0 %v286, 32
    %v289 = vpop.permute.xlu0 %288
    %v290 = vsel %vm184, %v289, 0
    %292 = vmatprep.subr.mxu0 0.0
    %293 = vmatpush1.msra.mxu0 %v47
    %294 = vmatprep.subr.mxu0 0.0
    %295 = vmatpush1.msra.mxu0 %v48
    %296 = vmatprep.subr.mxu0 0.0
    %297 = vmatpush1.msra.mxu0 %v49
    %298 = vmatprep.subr.mxu0 0.0
    %299 = vmatpush1.msra.mxu0 %v50
    %300 = vmatprep.subr.mxu0 0.0
    %301 = vmatpush1.msra.mxu0 0.0
    %302 = vmatprep.subr.mxu0 0.0
    %303 = vmatpush1.msra.mxu0 0.0
    %304 = vmatprep.subr.mxu0 0.0
    %305 = vmatpush1.msra.mxu0 0.0
    %306 = vmatprep.subr.mxu0 0.0
    %307 = vmatpush1.msra.mxu0 0.0
    %308 = vmatprep.subr.mxu0 0.0
    %309 = vmatpush1.msra.mxu0 0.0
    %310 = vmatprep.subr.mxu0 0.0
    %311 = vmatpush1.msra.mxu0 0.0
    %312 = vmatprep.subr.mxu0 0.0
    %313 = vmatpush1.msra.mxu0 0.0
    %314 = vmatprep.subr.mxu0 0.0
    %315 = vmatpush1.msra.mxu0 0.0
    %316 = vmatprep.subr.mxu0 0.0
    %317 = vmatpush1.msra.mxu0 0.0
    %318 = vmatprep.subr.mxu0 0.0
    %319 = vmatpush1.msra.mxu0 0.0
    %320 = vmatprep.subr.mxu0 0.0
    %321 = vmatpush1.msra.mxu0 0.0
    %322 = vmatprep.subr.mxu0 0.0
    %323 = vmatpush1.msra.mxu0 0.0
    %324 = vmatprep.subr.mxu0 0.0
    %325 = vmatpush1.msra.mxu0 0.0
    %326 = vmatprep.subr.mxu0 0.0
    %327 = vmatpush1.msra.mxu0 0.0
    %328 = vmatprep.subr.mxu0 0.0
    %329 = vmatpush1.msra.mxu0 0.0
    %330 = vmatprep.subr.mxu0 0.0
    %331 = vmatpush1.msra.mxu0 0.0
    %332 = vmatprep.subr.mxu0 0.0
    %333 = vmatpush1.msra.mxu0 0.0
    %334 = vmatprep.subr.mxu0 0.0
    %335 = vmatpush1.msra.mxu0 0.0
    %336 = vmatprep.subr.mxu0 0.0
    %337 = vmatpush1.msra.mxu0 0.0
    %338 = vmatprep.subr.mxu0 0.0
    %339 = vmatpush1.msra.mxu0 0.0
    %340 = vmatprep.subr.mxu0 0.0
    %341 = vmatpush1.msra.mxu0 0.0
    %342 = vmatprep.subr.mxu0 0.0
    %343 = vmatpush1.msra.mxu0 0.0
    %344 = vmatprep.subr.mxu0 0.0
    %345 = vmatpush1.msra.mxu0 0.0
    %346 = vmatprep.subr.mxu0 0.0
    %347 = vmatpush1.msra.mxu0 0.0
    %348 = vmatprep.subr.mxu0 0.0
    %349 = vmatpush1.msra.mxu0 0.0
    %350 = vmatprep.subr.mxu0 0.0
    %351 = vmatpush1.msra.mxu0 0.0
    %352 = vmatprep.subr.mxu0 0.0
    %353 = vmatpush1.msra.mxu0 0.0
    %354 = vmatprep.subr.mxu0 0.0
    %355 = vmatpush1.msra.mxu0 0.0
    %356 = vmatprep.mubr.f32.mxu0 0.0
    %357 = vmatmul.mubr.f32.gmra.mrb[0].mxu0 %v290
    %v358 = vpop.f32.mrb[0].mxu0
    %v359 = vadd.f32 0.0, %v358
    %v360 = vpop.f32.mrb[0].mxu0
    %361 = vdwg.mxu0
    %v362 = vadd.f32 %v153, %v359
    %v363 = vxor.u32 %v362, 2147483648
    %v364 = vmul.f32 %v363, 1.442695
    %v365 = vpow.pop %v364
    %v366 = vadd.f32 %v365, 1.0
    %v367 = vrcp.pop %v366
    %v368 = vmul.f32 1.0, %v367
    %v369 = vtanh.pop %v362
    %v370 = vmul.f32 %v368, %v280
    %372 = vrot.lane.b32.xlu0 %v369, 64
    %v373 = vpop.permute.xlu0 %372
    %v375 = vmul.f32 %v368, %v373
    %377 = vrot.lane.b32.xlu0 %v375, 32
    %v378 = vpop.permute.xlu0 %377
    %v380 = vadd.f32 %v370, %v378
    %v381 = vtanh.pop %v380
    %383 = vrot.lane.b32.xlu0 %v381, 64
    %v384 = vpop.permute.xlu0 %383
    %v386 = vmul.f32 %v368, %v384
    %388 = vrot.lane.b32.xlu0 %v386, 32
    %v389 = vpop.permute.xlu0 %388
    %v390 = vsel %vm184, %v389, 0
    %392 = vmatprep.subr.mxu0 0.0
    %393 = vmatpush1.msra.mxu0 %v47
    %394 = vmatprep.subr.mxu0 0.0
    %395 = vmatpush1.msra.mxu0 %v48
    %396 = vmatprep.subr.mxu0 0.0
    %397 = vmatpush1.msra.mxu0 %v49
    %398 = vmatprep.subr.mxu0 0.0
    %399 = vmatpush1.msra.mxu0 %v50
    %400 = vmatprep.subr.mxu0 0.0
    %401 = vmatpush1.msra.mxu0 0.0
    %402 = vmatprep.subr.mxu0 0.0
    %403 = vmatpush1.msra.mxu0 0.0
    %404 = vmatprep.subr.mxu0 0.0
    %405 = vmatpush1.msra.mxu0 0.0
    %406 = vmatprep.subr.mxu0 0.0
    %407 = vmatpush1.msra.mxu0 0.0
    %408 = vmatprep.subr.mxu0 0.0
    %409 = vmatpush1.msra.mxu0 0.0
    %410 = vmatprep.subr.mxu0 0.0
    %411 = vmatpush1.msra.mxu0 0.0
    %412 = vmatprep.subr.mxu0 0.0
    %413 = vmatpush1.msra.mxu0 0.0
    %414 = vmatprep.subr.mxu0 0.0
    %415 = vmatpush1.msra.mxu0 0.0
    %416 = vmatprep.subr.mxu0 0.0
    %417 = vmatpush1.msra.mxu0 0.0
    %418 = vmatprep.subr.mxu0 0.0
    %419 = vmatpush1.msra.mxu0 0.0
    %420 = vmatprep.subr.mxu0 0.0
    %421 = vmatpush1.msra.mxu0 0.0
    %422 = vmatprep.subr.mxu0 0.0
    %423 = vmatpush1.msra.mxu0 0.0
    %424 = vmatprep.subr.mxu0 0.0
    %425 = vmatpush1.msra.mxu0 0.0
    %426 = vmatprep.subr.mxu0 0.0
    %427 = vmatpush1.msra.mxu0 0.0
    %428 = vmatprep.subr.mxu0 0.0
    %429 = vmatpush1.msra.mxu0 0.0
    %430 = vmatprep.subr.mxu0 0.0
    %431 = vmatpush1.msra.mxu0 0.0
    %432 = vmatprep.subr.mxu0 0.0
    %433 = vmatpush1.msra.mxu0 0.0
    %434 = vmatprep.subr.mxu0 0.0
    %435 = vmatpush1.msra.mxu0 0.0
    %436 = vmatprep.subr.mxu0 0.0
    %437 = vmatpush1.msra.mxu0 0.0
    %438 = vmatprep.subr.mxu0 0.0
    %439 = vmatpush1.msra.mxu0 0.0
    %440 = vmatprep.subr.mxu0 0.0
    %441 = vmatpush1.msra.mxu0 0.0
    %442 = vmatprep.subr.mxu0 0.0
    %443 = vmatpush1.msra.mxu0 0.0
    %444 = vmatprep.subr.mxu0 0.0
    %445 = vmatpush1.msra.mxu0 0.0
    %446 = vmatprep.subr.mxu0 0.0
    %447 = vmatpush1.msra.mxu0 0.0
    %448 = vmatprep.subr.mxu0 0.0
    %449 = vmatpush1.msra.mxu0 0.0
    %450 = vmatprep.subr.mxu0 0.0
    %451 = vmatpush1.msra.mxu0 0.0
    %452 = vmatprep.subr.mxu0 0.0
    %453 = vmatpush1.msra.mxu0 0.0
    %454 = vmatprep.subr.mxu0 0.0
    %455 = vmatpush1.msra.mxu0 0.0
    %456 = vmatprep.mubr.f32.mxu0 0.0
    %457 = vmatmul.mubr.f32.gmra.mrb[0].mxu0 %v390
    %v458 = vpop.f32.mrb[0].mxu0
    %v459 = vadd.f32 0.0, %v458
    %v460 = vpop.f32.mrb[0].mxu0
    %461 = vdwg.mxu0
    %v462 = vadd.f32 %v158, %v459
    %v463 = vxor.u32 %v462, 2147483648
    %v464 = vmul.f32 %v463, 1.442695
    %v465 = vpow.pop %v464
    %v466 = vadd.f32 %v465, 1.0
    %v467 = vrcp.pop %v466
    %v468 = vmul.f32 1.0, %v467
    %v469 = vtanh.pop %v462
    %v470 = vmul.f32 %v468, %v380
    %472 = vrot.lane.b32.xlu0 %v469, 64
    %v473 = vpop.permute.xlu0 %472
    %v475 = vmul.f32 %v468, %v473
    %477 = vrot.lane.b32.xlu0 %v475, 32
    %v478 = vpop.permute.xlu0 %477
    %v480 = vadd.f32 %v470, %v478
    %v481 = vtanh.pop %v480
    %483 = vrot.lane.b32.xlu0 %v481, 64
    %v484 = vpop.permute.xlu0 %483
    %v486 = vmul.f32 %v468, %v484
    %488 = vrot.lane.b32.xlu0 %v486, 32
    %v489 = vpop.permute.xlu0 %488
    %v490 = vsel %vm184, %v489, 0
    %492 = vmatprep.subr.mxu0 0.0
    %493 = vmatpush1.msra.mxu0 %v47
    %494 = vmatprep.subr.mxu0 0.0
    %495 = vmatpush1.msra.mxu0 %v48
    %496 = vmatprep.subr.mxu0 0.0
    %497 = vmatpush1.msra.mxu0 %v49
    %498 = vmatprep.subr.mxu0 0.0
    %499 = vmatpush1.msra.mxu0 %v50
    %500 = vmatprep.subr.mxu0 0.0
    %501 = vmatpush1.msra.mxu0 0.0
    %502 = vmatprep.subr.mxu0 0.0
    %503 = vmatpush1.msra.mxu0 0.0
    %504 = vmatprep.subr.mxu0 0.0
    %505 = vmatpush1.msra.mxu0 0.0
    %506 = vmatprep.subr.mxu0 0.0
    %507 = vmatpush1.msra.mxu0 0.0
    %508 = vmatprep.subr.mxu0 0.0
    %509 = vmatpush1.msra.mxu0 0.0
    %510 = vmatprep.subr.mxu0 0.0
    %511 = vmatpush1.msra.mxu0 0.0
    %512 = vmatprep.subr.mxu0 0.0
    %513 = vmatpush1.msra.mxu0 0.0
    %514 = vmatprep.subr.mxu0 0.0
    %515 = vmatpush1.msra.mxu0 0.0
    %516 = vmatprep.subr.mxu0 0.0
    %517 = vmatpush1.msra.mxu0 0.0
    %518 = vmatprep.subr.mxu0 0.0
    %519 = vmatpush1.msra.mxu0 0.0
    %520 = vmatprep.subr.mxu0 0.0
    %521 = vmatpush1.msra.mxu0 0.0
    %522 = vmatprep.subr.mxu0 0.0
    %523 = vmatpush1.msra.mxu0 0.0
    %524 = vmatprep.subr.mxu0 0.0
    %525 = vmatpush1.msra.mxu0 0.0
    %526 = vmatprep.subr.mxu0 0.0
    %527 = vmatpush1.msra.mxu0 0.0
    %528 = vmatprep.subr.mxu0 0.0
    %529 = vmatpush1.msra.mxu0 0.0
    %530 = vmatprep.subr.mxu0 0.0
    %531 = vmatpush1.msra.mxu0 0.0
    %532 = vmatprep.subr.mxu0 0.0
    %533 = vmatpush1.msra.mxu0 0.0
    %534 = vmatprep.subr.mxu0 0.0
    %535 = vmatpush1.msra.mxu0 0.0
    %536 = vmatprep.subr.mxu0 0.0
    %537 = vmatpush1.msra.mxu0 0.0
    %538 = vmatprep.subr.mxu0 0.0
    %539 = vmatpush1.msra.mxu0 0.0
    %540 = vmatprep.subr.mxu0 0.0
    %541 = vmatpush1.msra.mxu0 0.0
    %542 = vmatprep.subr.mxu0 0.0
    %543 = vmatpush1.msra.mxu0 0.0
    %544 = vmatprep.subr.mxu0 0.0
    %545 = vmatpush1.msra.mxu0 0.0
    %546 = vmatprep.subr.mxu0 0.0
    %547 = vmatpush1.msra.mxu0 0.0
    %548 = vmatprep.subr.mxu0 0.0
    %549 = vmatpush1.msra.mxu0 0.0
    %550 = vmatprep.subr.mxu0 0.0
    %551 = vmatpush1.msra.mxu0 0.0
    %552 = vmatprep.subr.mxu0 0.0
    %553 = vmatpush1.msra.mxu0 0.0
    %554 = vmatprep.subr.mxu0 0.0
    %555 = vmatpush1.msra.mxu0 0.0
    %556 = vmatprep.mubr.f32.mxu0 0.0
    %557 = vmatmul.mubr.f32.gmra.mrb[0].mxu0 %v490
    %v558 = vpop.f32.mrb[0].mxu0
    %v559 = vadd.f32 0.0, %v558
    %v560 = vpop.f32.mrb[0].mxu0
    %561 = vdwg.mxu0
    %v562 = vadd.f32 %v163, %v559
    %v563 = vxor.u32 %v562, 2147483648
    %v564 = vmul.f32 %v563, 1.442695
    %v565 = vpow.pop %v564
    %v566 = vadd.f32 %v565, 1.0
    %v567 = vrcp.pop %v566
    %v568 = vmul.f32 1.0, %v567
    %v569 = vtanh.pop %v562
    %v570 = vmul.f32 %v568, %v480
    %572 = vrot.lane.b32.xlu0 %v569, 64
    %v573 = vpop.permute.xlu0 %572
    %v575 = vmul.f32 %v568, %v573
    %577 = vrot.lane.b32.xlu0 %v575, 32
    %v578 = vpop.permute.xlu0 %577
    %v580 = vadd.f32 %v570, %v578
    %v581 = vtanh.pop %v580
    %583 = vrot.lane.b32.xlu0 %v581, 64
    %v584 = vpop.permute.xlu0 %583
    %v586 = vmul.f32 %v568, %v584
    %588 = vrot.lane.b32.xlu0 %v586, 32
    %v589 = vpop.permute.xlu0 %588
    %v590 = vsel %vm184, %v589, 0
    %592 = vmatprep.subr.mxu0 0.0
    %593 = vmatpush1.msra.mxu0 %v47
    %594 = vmatprep.subr.mxu0 0.0
    %595 = vmatpush1.msra.mxu0 %v48
    %596 = vmatprep.subr.mxu0 0.0
    %597 = vmatpush1.msra.mxu0 %v49
    %598 = vmatprep.subr.mxu0 0.0
    %599 = vmatpush1.msra.mxu0 %v50
    %600 = vmatprep.subr.mxu0 0.0
    %601 = vmatpush1.msra.mxu0 0.0
    %602 = vmatprep.subr.mxu0 0.0
    %603 = vmatpush1.msra.mxu0 0.0
    %604 = vmatprep.subr.mxu0 0.0
    %605 = vmatpush1.msra.mxu0 0.0
    %606 = vmatprep.subr.mxu0 0.0
    %607 = vmatpush1.msra.mxu0 0.0
    %608 = vmatprep.subr.mxu0 0.0
    %609 = vmatpush1.msra.mxu0 0.0
    %610 = vmatprep.subr.mxu0 0.0
    %611 = vmatpush1.msra.mxu0 0.0
    %612 = vmatprep.subr.mxu0 0.0
    %613 = vmatpush1.msra.mxu0 0.0
    %614 = vmatprep.subr.mxu0 0.0
    %615 = vmatpush1.msra.mxu0 0.0
    %616 = vmatprep.subr.mxu0 0.0
    %617 = vmatpush1.msra.mxu0 0.0
    %618 = vmatprep.subr.mxu0 0.0
    %619 = vmatpush1.msra.mxu0 0.0
    %620 = vmatprep.subr.mxu0 0.0
    %621 = vmatpush1.msra.mxu0 0.0
    %622 = vmatprep.subr.mxu0 0.0
    %623 = vmatpush1.msra.mxu0 0.0
    %624 = vmatprep.subr.mxu0 0.0
    %625 = vmatpush1.msra.mxu0 0.0
    %626 = vmatprep.subr.mxu0 0.0
    %627 = vmatpush1.msra.mxu0 0.0
    %628 = vmatprep.subr.mxu0 0.0
    %629 = vmatpush1.msra.mxu0 0.0
    %630 = vmatprep.subr.mxu0 0.0
    %631 = vmatpush1.msra.mxu0 0.0
    %632 = vmatprep.subr.mxu0 0.0
    %633 = vmatpush1.msra.mxu0 0.0
    %634 = vmatprep.subr.mxu0 0.0
    %635 = vmatpush1.msra.mxu0 0.0
    %636 = vmatprep.subr.mxu0 0.0
    %637 = vmatpush1.msra.mxu0 0.0
    %638 = vmatprep.subr.mxu0 0.0
    %639 = vmatpush1.msra.mxu0 0.0
    %640 = vmatprep.subr.mxu0 0.0
    %641 = vmatpush1.msra.mxu0 0.0
    %642 = vmatprep.subr.mxu0 0.0
    %643 = vmatpush1.msra.mxu0 0.0
    %644 = vmatprep.subr.mxu0 0.0
    %645 = vmatpush1.msra.mxu0 0.0
    %646 = vmatprep.subr.mxu0 0.0
    %647 = vmatpush1.msra.mxu0 0.0
    %648 = vmatprep.subr.mxu0 0.0
    %649 = vmatpush1.msra.mxu0 0.0
    %650 = vmatprep.subr.mxu0 0.0
    %651 = vmatpush1.msra.mxu0 0.0
    %652 = vmatprep.subr.mxu0 0.0
    %653 = vmatpush1.msra.mxu0 0.0
    %654 = vmatprep.subr.mxu0 0.0
    %655 = vmatpush1.msra.mxu0 0.0
    %656 = vmatprep.mubr.f32.mxu0 0.0
    %657 = vmatmul.mubr.f32.gmra.mrb[0].mxu0 %v590
    %v658 = vpop.f32.mrb[0].mxu0
    %v659 = vadd.f32 0.0, %v658
    %v660 = vpop.f32.mrb[0].mxu0
    %661 = vdwg.mxu0
    %v662 = vadd.f32 %v168, %v659
    %v663 = vxor.u32 %v662, 2147483648
    %v664 = vmul.f32 %v663, 1.442695
    %v665 = vpow.pop %v664
    %v666 = vadd.f32 %v665, 1.0
    %v667 = vrcp.pop %v666
    %v668 = vmul.f32 1.0, %v667
    %v669 = vtanh.pop %v662
    %v670 = vmul.f32 %v668, %v580
    %672 = vrot.lane.b32.xlu0 %v669, 64
    %v673 = vpop.permute.xlu0 %672
    %v675 = vmul.f32 %v668, %v673
    %677 = vrot.lane.b32.xlu0 %v675, 32
    %v678 = vpop.permute.xlu0 %677
    %v680 = vadd.f32 %v670, %v678
    %v681 = vtanh.pop %v680
    %683 = vrot.lane.b32.xlu0 %v681, 64
    %v684 = vpop.permute.xlu0 %683
    %v686 = vmul.f32 %v668, %v684
    %688 = vrot.lane.b32.xlu0 %v686, 32
    %v689 = vpop.permute.xlu0 %688
    %v690 = vsel %vm184, %v689, 0
    %692 = vmatprep.subr.mxu0 0.0
    %693 = vmatpush1.msra.mxu0 %v47
    %694 = vmatprep.subr.mxu0 0.0
    %695 = vmatpush1.msra.mxu0 %v48
    %696 = vmatprep.subr.mxu0 0.0
    %697 = vmatpush1.msra.mxu0 %v49
    %698 = vmatprep.subr.mxu0 0.0
    %699 = vmatpush1.msra.mxu0 %v50
    %700 = vmatprep.subr.mxu0 0.0
    %701 = vmatpush1.msra.mxu0 0.0
    %702 = vmatprep.subr.mxu0 0.0
    %703 = vmatpush1.msra.mxu0 0.0
    %704 = vmatprep.subr.mxu0 0.0
    %705 = vmatpush1.msra.mxu0 0.0
    %706 = vmatprep.subr.mxu0 0.0
    %707 = vmatpush1.msra.mxu0 0.0
    %708 = vmatprep.subr.mxu0 0.0
    %709 = vmatpush1.msra.mxu0 0.0
    %710 = vmatprep.subr.mxu0 0.0
    %711 = vmatpush1.msra.mxu0 0.0
    %712 = vmatprep.subr.mxu0 0.0
    %713 = vmatpush1.msra.mxu0 0.0
    %714 = vmatprep.subr.mxu0 0.0
    %715 = vmatpush1.msra.mxu0 0.0
    %716 = vmatprep.subr.mxu0 0.0
    %717 = vmatpush1.msra.mxu0 0.0
    %718 = vmatprep.subr.mxu0 0.0
    %719 = vmatpush1.msra.mxu0 0.0
    %720 = vmatprep.subr.mxu0 0.0
    %721 = vmatpush1.msra.mxu0 0.0
    %722 = vmatprep.subr.mxu0 0.0
    %723 = vmatpush1.msra.mxu0 0.0
    %724 = vmatprep.subr.mxu0 0.0
    %725 = vmatpush1.msra.mxu0 0.0
    %726 = vmatprep.subr.mxu0 0.0
    %727 = vmatpush1.msra.mxu0 0.0
    %728 = vmatprep.subr.mxu0 0.0
    %729 = vmatpush1.msra.mxu0 0.0
    %730 = vmatprep.subr.mxu0 0.0
    %731 = vmatpush1.msra.mxu0 0.0
    %732 = vmatprep.subr.mxu0 0.0
    %733 = vmatpush1.msra.mxu0 0.0
    %734 = vmatprep.subr.mxu0 0.0
    %735 = vmatpush1.msra.mxu0 0.0
    %736 = vmatprep.subr.mxu0 0.0
    %737 = vmatpush1.msra.mxu0 0.0
    %738 = vmatprep.subr.mxu0 0.0
    %739 = vmatpush1.msra.mxu0 0.0
    %740 = vmatprep.subr.mxu0 0.0
    %741 = vmatpush1.msra.mxu0 0.0
    %742 = vmatprep.subr.mxu0 0.0
    %743 = vmatpush1.msra.mxu0 0.0
    %744 = vmatprep.subr.mxu0 0.0
    %745 = vmatpush1.msra.mxu0 0.0
    %746 = vmatprep.subr.mxu0 0.0
    %747 = vmatpush1.msra.mxu0 0.0
    %748 = vmatprep.subr.mxu0 0.0
    %749 = vmatpush1.msra.mxu0 0.0
    %750 = vmatprep.subr.mxu0 0.0
    %751 = vmatpush1.msra.mxu0 0.0
    %752 = vmatprep.subr.mxu0 0.0
    %753 = vmatpush1.msra.mxu0 0.0
    %754 = vmatprep.subr.mxu0 0.0
    %755 = vmatpush1.msra.mxu0 0.0
    %756 = vmatprep.mubr.f32.mxu0 0.0
    %757 = vmatmul.mubr.f32.gmra.mrb[0].mxu0 %v690
    %v758 = vpop.f32.mrb[0].mxu0
    %v759 = vadd.f32 0.0, %v758
    %v760 = vpop.f32.mrb[0].mxu0
    %761 = vdwg.mxu0
    %v762 = vadd.f32 %v173, %v759
    %v763 = vxor.u32 %v762, 2147483648
    %v764 = vmul.f32 %v763, 1.442695
    %v765 = vpow.pop %v764
    %v766 = vadd.f32 %v765, 1.0
    %v767 = vrcp.pop %v766
    %v768 = vmul.f32 1.0, %v767
    %v769 = vtanh.pop %v762
    %v770 = vmul.f32 %v768, %v680
    %772 = vrot.lane.b32.xlu0 %v769, 64
    %v773 = vpop.permute.xlu0 %772
    %v775 = vmul.f32 %v768, %v773
    %777 = vrot.lane.b32.xlu0 %v775, 32
    %v778 = vpop.permute.xlu0 %777
    %v780 = vadd.f32 %v770, %v778
    %v781 = vtanh.pop %v780
    %783 = vrot.lane.b32.xlu0 %v781, 64
    %v784 = vpop.permute.xlu0 %783
    %v786 = vmul.f32 %v768, %v784
    %788 = vrot.lane.b32.xlu0 %v786, 32
    %v789 = vpop.permute.xlu0 %788
    %v790 = vsel %vm184, %v789, 0
    %792 = vmatprep.subr.mxu0 0.0
    %793 = vmatpush1.msra.mxu0 %v47
    %794 = vmatprep.subr.mxu0 0.0
    %795 = vmatpush1.msra.mxu0 %v48
    %796 = vmatprep.subr.mxu0 0.0
    %797 = vmatpush1.msra.mxu0 %v49
    %798 = vmatprep.subr.mxu0 0.0
    %799 = vmatpush1.msra.mxu0 %v50
    %800 = vmatprep.subr.mxu0 0.0
    %801 = vmatpush1.msra.mxu0 0.0
    %802 = vmatprep.subr.mxu0 0.0
    %803 = vmatpush1.msra.mxu0 0.0
    %804 = vmatprep.subr.mxu0 0.0
    %805 = vmatpush1.msra.mxu0 0.0
    %806 = vmatprep.subr.mxu0 0.0
    %807 = vmatpush1.msra.mxu0 0.0
    %808 = vmatprep.subr.mxu0 0.0
    %809 = vmatpush1.msra.mxu0 0.0
    %810 = vmatprep.subr.mxu0 0.0
    %811 = vmatpush1.msra.mxu0 0.0
    %812 = vmatprep.subr.mxu0 0.0
    %813 = vmatpush1.msra.mxu0 0.0
    %814 = vmatprep.subr.mxu0 0.0
    %815 = vmatpush1.msra.mxu0 0.0
    %816 = vmatprep.subr.mxu0 0.0
    %817 = vmatpush1.msra.mxu0 0.0
    %818 = vmatprep.subr.mxu0 0.0
    %819 = vmatpush1.msra.mxu0 0.0
    %820 = vmatprep.subr.mxu0 0.0
    %821 = vmatpush1.msra.mxu0 0.0
    %822 = vmatprep.subr.mxu0 0.0
    %823 = vmatpush1.msra.mxu0 0.0
    %824 = vmatprep.subr.mxu0 0.0
    %825 = vmatpush1.msra.mxu0 0.0
    %826 = vmatprep.subr.mxu0 0.0
    %827 = vmatpush1.msra.mxu0 0.0
    %828 = vmatprep.subr.mxu0 0.0
    %829 = vmatpush1.msra.mxu0 0.0
    %830 = vmatprep.subr.mxu0 0.0
    %831 = vmatpush1.msra.mxu0 0.0
    %832 = vmatprep.subr.mxu0 0.0
    %833 = vmatpush1.msra.mxu0 0.0
    %834 = vmatprep.subr.mxu0 0.0
    %835 = vmatpush1.msra.mxu0 0.0
    %836 = vmatprep.subr.mxu0 0.0
    %837 = vmatpush1.msra.mxu0 0.0
    %838 = vmatprep.subr.mxu0 0.0
    %839 = vmatpush1.msra.mxu0 0.0
    %840 = vmatprep.subr.mxu0 0.0
    %841 = vmatpush1.msra.mxu0 0.0
    %842 = vmatprep.subr.mxu0 0.0
    %843 = vmatpush1.msra.mxu0 0.0
    %844 = vmatprep.subr.mxu0 0.0
    %845 = vmatpush1.msra.mxu0 0.0
    %846 = vmatprep.subr.mxu0 0.0
    %847 = vmatpush1.msra.mxu0 0.0
    %848 = vmatprep.subr.mxu0 0.0
    %849 = vmatpush1.msra.mxu0 0.0
    %850 = vmatprep.subr.mxu0 0.0
    %851 = vmatpush1.msra.mxu0 0.0
    %852 = vmatprep.subr.mxu0 0.0
    %853 = vmatpush1.msra.mxu0 0.0
    %854 = vmatprep.subr.mxu0 0.0
    %855 = vmatpush1.msra.mxu0 0.0
    %856 = vmatprep.mubr.f32.mxu0 0.0
    %857 = vmatmul.mubr.f32.gmra.mrb[0].mxu0 %v790
    %v858 = vpop.f32.mrb[0].mxu0
    %v859 = vadd.f32 0.0, %v858
    %v860 = vpop.f32.mrb[0].mxu0
    %861 = vdwg.mxu0
    %v862 = vadd.f32 %v178, %v859
    %v863 = vxor.u32 %v862, 2147483648
    %v864 = vmul.f32 %v863, 1.442695
    %v865 = vpow.pop %v864
    %v866 = vadd.f32 %v865, 1.0
    %v867 = vrcp.pop %v866
    %v868 = vmul.f32 1.0, %v867
    %v869 = vtanh.pop %v862
    %v870 = vmul.f32 %v868, %v780
    %872 = vrot.lane.b32.xlu0 %v869, 64
    %v873 = vpop.permute.xlu0 %872
    %v875 = vmul.f32 %v868, %v873
    %877 = vrot.lane.b32.xlu0 %v875, 32
    %v878 = vpop.permute.xlu0 %877
    %v880 = vadd.f32 %v870, %v878
    %v881 = vtanh.pop %v880
    %883 = vrot.lane.b32.xlu0 %v881, 64
    %v884 = vpop.permute.xlu0 %883
    %v886 = vmul.f32 %v868, %v884
    %888 = vrot.lane.b32.xlu0 %v886, 32
    %v889 = vpop.permute.xlu0 %888
    %v890 = vsel %vm184, %v889, 0
    %892 = vmatprep.subr.mxu0 0.0
    %893 = vmatpush1.msra.mxu0 %v47
    %894 = vmatprep.subr.mxu0 0.0
    %895 = vmatpush1.msra.mxu0 %v48
    %896 = vmatprep.subr.mxu0 0.0
    %897 = vmatpush1.msra.mxu0 %v49
    %898 = vmatprep.subr.mxu0 0.0
    %899 = vmatpush1.msra.mxu0 %v50
    %900 = vmatprep.subr.mxu0 0.0
    %901 = vmatpush1.msra.mxu0 0.0
    %902 = vmatprep.subr.mxu0 0.0
    %903 = vmatpush1.msra.mxu0 0.0
    %904 = vmatprep.subr.mxu0 0.0
    %905 = vmatpush1.msra.mxu0 0.0
    %906 = vmatprep.subr.mxu0 0.0
    %907 = vmatpush1.msra.mxu0 0.0
    %908 = vmatprep.subr.mxu0 0.0
    %909 = vmatpush1.msra.mxu0 0.0
    %910 = vmatprep.subr.mxu0 0.0
    %911 = vmatpush1.msra.mxu0 0.0
    %912 = vmatprep.subr.mxu0 0.0
    %913 = vmatpush1.msra.mxu0 0.0
    %914 = vmatprep.subr.mxu0 0.0
    %915 = vmatpush1.msra.mxu0 0.0
    %916 = vmatprep.subr.mxu0 0.0
    %917 = vmatpush1.msra.mxu0 0.0
    %918 = vmatprep.subr.mxu0 0.0
    %919 = vmatpush1.msra.mxu0 0.0
    %920 = vmatprep.subr.mxu0 0.0
    %921 = vmatpush1.msra.mxu0 0.0
    %922 = vmatprep.subr.mxu0 0.0
    %923 = vmatpush1.msra.mxu0 0.0
    %924 = vmatprep.subr.mxu0 0.0
    %925 = vmatpush1.msra.mxu0 0.0
    %926 = vmatprep.subr.mxu0 0.0
    %927 = vmatpush1.msra.mxu0 0.0
    %928 = vmatprep.subr.mxu0 0.0
    %929 = vmatpush1.msra.mxu0 0.0
    %930 = vmatprep.subr.mxu0 0.0
    %931 = vmatpush1.msra.mxu0 0.0
    %932 = vmatprep.subr.mxu0 0.0
    %933 = vmatpush1.msra.mxu0 0.0
    %934 = vmatprep.subr.mxu0 0.0
    %935 = vmatpush1.msra.mxu0 0.0
    %936 = vmatprep.subr.mxu0 0.0
    %937 = vmatpush1.msra.mxu0 0.0
    %938 = vmatprep.subr.mxu0 0.0
    %939 = vmatpush1.msra.mxu0 0.0
    %940 = vmatprep.subr.mxu0 0.0
    %941 = vmatpush1.msra.mxu0 0.0
    %942 = vmatprep.subr.mxu0 0.0
    %943 = vmatpush1.msra.mxu0 0.0
    %944 = vmatprep.subr.mxu0 0.0
    %945 = vmatpush1.msra.mxu0 0.0
    %946 = vmatprep.subr.mxu0 0.0
    %947 = vmatpush1.msra.mxu0 0.0
    %948 = vmatprep.subr.mxu0 0.0
    %949 = vmatpush1.msra.mxu0 0.0
    %950 = vmatprep.subr.mxu0 0.0
    %951 = vmatpush1.msra.mxu0 0.0
    %952 = vmatprep.subr.mxu0 0.0
    %953 = vmatpush1.msra.mxu0 0.0
    %954 = vmatprep.subr.mxu0 0.0
    %955 = vmatpush1.msra.mxu0 0.0
    %956 = vmatprep.mubr.f32.mxu0 0.0
    %957 = vmatmul.mubr.f32.gmra.mrb[0].mxu0 %v890
    %v958 = vpop.f32.mrb[0].mxu0
    %v959 = vadd.f32 0.0, %v958
    %v960 = vpop.f32.mrb[0].mxu0
    %961 = vdwg.mxu0
    %v962 = vadd.f32 %v183, %v959
    %v963 = vxor.u32 %v962, 2147483648
    %v964 = vmul.f32 %v963, 1.442695
    %v965 = vpow.pop %v964
    %v966 = vadd.f32 %v965, 1.0
    %v967 = vrcp.pop %v966
    %v968 = vmul.f32 1.0, %v967
    %v969 = vtanh.pop %v962
    %v970 = vmul.f32 %v968, %v880
    %972 = vrot.lane.b32.xlu0 %v969, 64
    %v973 = vpop.permute.xlu0 %972
    %v975 = vmul.f32 %v968, %v973
    %977 = vrot.lane.b32.xlu0 %v975, 32
    %v978 = vpop.permute.xlu0 %977
    %v980 = vadd.f32 %v970, %v978
    %v981 = vtanh.pop %v980
    %983 = vrot.lane.b32.xlu0 %v981, 64
    %v984 = vpop.permute.xlu0 %983
    %v986 = vmul.f32 %v968, %v984
    %s987 = smul.u32 400, 1
    %s988 = sshll.u32 %s987, 4
    %989 = dma.done [#allocation3], %s988
    %v990 = vld [vmem:[%s1] sm:$0x3]
    %992 = vrot.lane.b32.xlu0 %v386, 64
    %v993 = vpop.permute.xlu0 %992
    %995 = vrot.lane.b32.xlu0 %v486, 96
    %v996 = vpop.permute.xlu0 %995
    %999 = vrot.lane.b32.xlu0 %v786, 64
    %v1000 = vpop.permute.xlu0 %999
    %1002 = vrot.lane.b32.xlu0 %v886, 96
    %v1003 = vpop.permute.xlu0 %1002
    %v1005 = vsel %vm184, %v289, %v993
    %vm1006 = vcmask 523264
    %v1007 = vsel %vm1006, %v1005, %v996
    %vm1008 = vcmask 785408
    %v1009 = vsel %vm1008, %v1007, %v586
    %v1010 = vsel %vm184, %v689, %v1000
    %v1011 = vsel %vm1006, %v1010, %v1003
    %v1012 = vsel %vm1008, %v1011, %v986
    %v1013 = vld [vmem:[#allocation2] sm:$0xff]
    %v1014 = vld [vmem:[#allocation2 + $0x8] sm:$0xff]
    %v1015 = vld [vmem:[#allocation2 + $0x10] sm:$0xff]
    %v1016 = vld [vmem:[#allocation2 + $0x18] sm:$0xff]
    %v1017 = vld [vmem:[#allocation2 + $0x20] sm:$0xff]
    %v1018 = vld [vmem:[#allocation2 + $0x28] sm:$0xff]
    %v1019 = vld [vmem:[#allocation2 + $0x30] sm:$0xff]
    %v1020 = vld [vmem:[#allocation2 + $0x38] sm:$0xff]
    %v1021 = vld [vmem:[#allocation2 + $0x40] sm:$0xff]
    %v1022 = vld [vmem:[#allocation2 + $0x48] sm:$0xff]
    %v1023 = vld [vmem:[#allocation2 + $0x50] sm:$0xff]
    %v1024 = vld [vmem:[#allocation2 + $0x58] sm:$0xff]
    %v1025 = vld [vmem:[#allocation2 + $0x60] sm:$0xff]
    %v1026 = vld [vmem:[#allocation2 + $0x68] sm:$0xff]
    %v1027 = vld [vmem:[#allocation2 + $0x70] sm:$0xff]
    %v1028 = vld [vmem:[#allocation2 + $0x78] sm:$0xff]
    %v1029 = vld [vmem:[#allocation2 + $0x80] sm:$0xff]
    %v1030 = vld [vmem:[#allocation2 + $0x88] sm:$0xff]
    %v1031 = vld [vmem:[#allocation2 + $0x90] sm:$0xff]
    %v1032 = vld [vmem:[#allocation2 + $0x98] sm:$0xff]
    %v1033 = vld [vmem:[#allocation2 + $0xa0] sm:$0xff]
    %v1034 = vld [vmem:[#allocation2 + $0xa8] sm:$0xff]
    %v1035 = vld [vmem:[#allocation2 + $0xb0] sm:$0xff]
    %v1036 = vld [vmem:[#allocation2 + $0xb8] sm:$0xff]
    %v1037 = vld [vmem:[#allocation2 + $0xc0] sm:$0xff]
    %v1038 = vld [vmem:[#allocation2 + $0xc8] sm:$0xff]
    %v1039 = vld [vmem:[#allocation2 + $0xd0] sm:$0xff]
    %v1040 = vld [vmem:[#allocation2 + $0xd8] sm:$0xff]
    %v1041 = vld [vmem:[#allocation2 + $0xe0] sm:$0xff]
    %v1042 = vld [vmem:[#allocation2 + $0xe8] sm:$0xff]
    %v1043 = vld [vmem:[#allocation2 + $0xf0] sm:$0xff]
    %v1044 = vld [vmem:[#allocation2 + $0xf8] sm:$0xff]
    %v1045 = vld [vmem:[#allocation2 + $0x100] sm:$0xff]
    %v1046 = vld [vmem:[#allocation2 + $0x108] sm:$0xff]
    %v1047 = vlaneseq
    %v1048 = vshrl.u32 %v1047, 7
    %v1049 = vsub.s32 1, %v1048
    %v1050 = vrot.slane %v51, %v1049
    %vm1051 = vcmask 130048
    %v1053 = vsel %vm1051, %v990, 0
    %1055 = vmatprep.subr.mxu0 0.0
    %1056 = vmatpush1.msra.mxu0 %v1013
    %1057 = vmatprep.subr.mxu0 0.0
    %1058 = vmatpush1.msra.mxu0 %v1014
    %1059 = vmatprep.subr.mxu0 0.0
    %1060 = vmatpush1.msra.mxu0 %v1015
    %1061 = vmatprep.subr.mxu0 0.0
    %1062 = vmatpush1.msra.mxu0 %v1016
    %1063 = vmatprep.subr.mxu0 0.0
    %1064 = vmatpush1.msra.mxu0 %v1017
    %1065 = vmatprep.subr.mxu0 0.0
    %1066 = vmatpush1.msra.mxu0 %v1018
    %1067 = vmatprep.subr.mxu0 0.0
    %1068 = vmatpush1.msra.mxu0 %v1019
    %1069 = vmatprep.subr.mxu0 0.0
    %1070 = vmatpush1.msra.mxu0 %v1020
    %1071 = vmatprep.subr.mxu0 0.0
    %1072 = vmatpush1.msra.mxu0 %v1021
    %1073 = vmatprep.subr.mxu0 0.0
    %1074 = vmatpush1.msra.mxu0 %v1022
    %1075 = vmatprep.subr.mxu0 0.0
    %1076 = vmatpush1.msra.mxu0 %v1023
    %1077 = vmatprep.subr.mxu0 0.0
    %1078 = vmatpush1.msra.mxu0 %v1024
    %1079 = vmatprep.subr.mxu0 0.0
    %1080 = vmatpush1.msra.mxu0 %v1025
    %1081 = vmatprep.subr.mxu0 0.0
    %1082 = vmatpush1.msra.mxu0 %v1026
    %1083 = vmatprep.subr.mxu0 0.0
    %1084 = vmatpush1.msra.mxu0 %v1027
    %1085 = vmatprep.subr.mxu0 0.0
    %1086 = vmatpush1.msra.mxu0 %v1028
    %1087 = vmatprep.subr.mxu0 0.0
    %1088 = vmatpush1.msra.mxu0 %v1029
    %1089 = vmatprep.subr.mxu0 0.0
    %1090 = vmatpush1.msra.mxu0 %v1030
    %1091 = vmatprep.subr.mxu0 0.0
    %1092 = vmatpush1.msra.mxu0 %v1031
    %1093 = vmatprep.subr.mxu0 0.0
    %1094 = vmatpush1.msra.mxu0 %v1032
    %1095 = vmatprep.subr.mxu0 0.0
    %1096 = vmatpush1.msra.mxu0 %v1033
    %1097 = vmatprep.subr.mxu0 0.0
    %1098 = vmatpush1.msra.mxu0 %v1034
    %1099 = vmatprep.subr.mxu0 0.0
    %1100 = vmatpush1.msra.mxu0 %v1035
    %1101 = vmatprep.subr.mxu0 0.0
    %1102 = vmatpush1.msra.mxu0 %v1036
    %1103 = vmatprep.subr.mxu0 0.0
    %1104 = vmatpush1.msra.mxu0 %v1037
    %1105 = vmatprep.subr.mxu0 0.0
    %1106 = vmatpush1.msra.mxu0 %v1038
    %1107 = vmatprep.subr.mxu0 0.0
    %1108 = vmatpush1.msra.mxu0 %v1039
    %1109 = vmatprep.subr.mxu0 0.0
    %1110 = vmatpush1.msra.mxu0 %v1040
    %1111 = vmatprep.subr.mxu0 0.0
    %1112 = vmatpush1.msra.mxu0 %v1041
    %1113 = vmatprep.subr.mxu0 0.0
    %1114 = vmatpush1.msra.mxu0 %v1042
    %1115 = vmatprep.subr.mxu0 0.0
    %1116 = vmatpush1.msra.mxu0 %v1043
    %1117 = vmatprep.subr.mxu0 0.0
    %1118 = vmatpush1.msra.mxu0 %v1044
    %1119 = vmatprep.mubr.f32.mxu0 %v1012
    %1120 = vmatmul.mubr.f32.gmra.mrb[0].mxu0 %v1009
    %v1121 = vpop.f32.mrb[0].mxu0
    %v1122 = vadd.f32 %v1050, %v1121
    %v1123 = vpop.f32.mrb[0].mxu0
    %1124 = vdwg.mxu0
    %1125 = vmatprep.subr.mxu0 0.0
    %1126 = vmatpush1.msra.mxu0 %v1045
    %1127 = vmatprep.subr.mxu0 0.0
    %1128 = vmatpush1.msra.mxu0 %v1046
    %1129 = vmatprep.subr.mxu0 0.0
    %1130 = vmatpush1.msra.mxu0 0.0
    %1131 = vmatprep.subr.mxu0 0.0
    %1132 = vmatpush1.msra.mxu0 0.0
    %1133 = vmatprep.subr.mxu0 0.0
    %1134 = vmatpush1.msra.mxu0 0.0
    %1135 = vmatprep.subr.mxu0 0.0
    %1136 = vmatpush1.msra.mxu0 0.0
    %1137 = vmatprep.subr.mxu0 0.0
    %1138 = vmatpush1.msra.mxu0 0.0
    %1139 = vmatprep.subr.mxu0 0.0
    %1140 = vmatpush1.msra.mxu0 0.0
    %1141 = vmatprep.subr.mxu0 0.0
    %1142 = vmatpush1.msra.mxu0 0.0
    %1143 = vmatprep.subr.mxu0 0.0
    %1144 = vmatpush1.msra.mxu0 0.0
    %1145 = vmatprep.subr.mxu0 0.0
    %1146 = vmatpush1.msra.mxu0 0.0
    %1147 = vmatprep.subr.mxu0 0.0
    %1148 = vmatpush1.msra.mxu0 0.0
    %1149 = vmatprep.subr.mxu0 0.0
    %1150 = vmatpush1.msra.mxu0 0.0
    %1151 = vmatprep.subr.mxu0 0.0
    %1152 = vmatpush1.msra.mxu0 0.0
    %1153 = vmatprep.subr.mxu0 0.0
    %1154 = vmatpush1.msra.mxu0 0.0
    %1155 = vmatprep.subr.mxu0 0.0
    %1156 = vmatpush1.msra.mxu0 0.0
    %1157 = vmatprep.subr.mxu0 0.0
    %1158 = vmatpush1.msra.mxu0 0.0
    %1159 = vmatprep.subr.mxu0 0.0
    %1160 = vmatpush1.msra.mxu0 0.0
    %1161 = vmatprep.subr.mxu0 0.0
    %1162 = vmatpush1.msra.mxu0 0.0
    %1163 = vmatprep.subr.mxu0 0.0
    %1164 = vmatpush1.msra.mxu0 0.0
    %1165 = vmatprep.subr.mxu0 0.0
    %1166 = vmatpush1.msra.mxu0 0.0
    %1167 = vmatprep.subr.mxu0 0.0
    %1168 = vmatpush1.msra.mxu0 0.0
    %1169 = vmatprep.subr.mxu0 0.0
    %1170 = vmatpush1.msra.mxu0 0.0
    %1171 = vmatprep.subr.mxu0 0.0
    %1172 = vmatpush1.msra.mxu0 0.0
    %1173 = vmatprep.subr.mxu0 0.0
    %1174 = vmatpush1.msra.mxu0 0.0
    %1175 = vmatprep.subr.mxu0 0.0
    %1176 = vmatpush1.msra.mxu0 0.0
    %1177 = vmatprep.subr.mxu0 0.0
    %1178 = vmatpush1.msra.mxu0 0.0
    %1179 = vmatprep.subr.mxu0 0.0
    %1180 = vmatpush1.msra.mxu0 0.0
    %1181 = vmatprep.subr.mxu0 0.0
    %1182 = vmatpush1.msra.mxu0 0.0
    %1183 = vmatprep.subr.mxu0 0.0
    %1184 = vmatpush1.msra.mxu0 0.0
    %1185 = vmatprep.subr.mxu0 0.0
    %1186 = vmatpush1.msra.mxu0 0.0
    %1187 = vmatprep.subr.mxu0 0.0
    %1188 = vmatpush1.msra.mxu0 0.0
    %1189 = vmatprep.mubr.f32.mxu0 0.0
    %1190 = vmatmul.mubr.f32.gmra.mrb[0].mxu0 %v1053
    %v1191 = vpop.f32.mrb[0].mxu0
    %v1192 = vadd.f32 %v1122, %v1191
    %v1193 = vpop.f32.mrb[0].mxu0
    %1194 = vdwg.mxu0
    %v1195 = vmax.f32 %v1192, 0.0
    %v1196 = vld [vmem:[#allocation2 + $0x110] sm:$0xff]
    %v1197 = vld [vmem:[#allocation2 + $0x118] sm:$0xff]
    %v1198 = vld [vmem:[#allocation2 + $0x120] sm:$0xff]
    %v1199 = vld [vmem:[#allocation2 + $0x128] sm:$0xff]
    %v1200 = vld [vmem:[#allocation2 + $0x130] sm:$0xff]
    %v1201 = vld [vmem:[#allocation2 + $0x138] sm:$0xff]
    %v1202 = vld [vmem:[#allocation2 + $0x140] sm:$0xff]
    %v1203 = vld [vmem:[#allocation2 + $0x148] sm:$0xff]
    %v1204 = vld [vmem:[#allocation2 + $0x150] sm:$0xff]
    %v1205 = vld [vmem:[#allocation2 + $0x158] sm:$0xff]
    %v1206 = vld [vmem:[#allocation2 + $0x160] sm:$0xff]
    %v1207 = vld [vmem:[#allocation2 + $0x168] sm:$0xff]
    %v1208 = vld [vmem:[#allocation2 + $0x170] sm:$0xff]
    %v1209 = vld [vmem:[#allocation2 + $0x178] sm:$0xff]
    %v1210 = vld [vmem:[#allocation2 + $0x180] sm:$0xff]
    %v1211 = vld [vmem:[#allocation2 + $0x188] sm:$0xff]
    %v1212 = vlaneseq
    %v1213 = vshrl.u32 %v1212, 7
    %v1214 = vsub.s32 2, %v1213
    %v1215 = vrot.slane %v51, %v1214
    %1216 = vmatprep.subr.mxu0 0.0
    %1217 = vmatpush1.msra.mxu0 %v1196
    %1218 = vmatprep.subr.mxu0 0.0
    %1219 = vmatpush1.msra.mxu0 %v1197
    %1220 = vmatprep.subr.mxu0 0.0
    %1221 = vmatpush1.msra.mxu0 %v1198
    %1222 = vmatprep.subr.mxu0 0.0
    %1223 = vmatpush1.msra.mxu0 %v1199
    %1224 = vmatprep.subr.mxu0 0.0
    %1225 = vmatpush1.msra.mxu0 %v1200
    %1226 = vmatprep.subr.mxu0 0.0
    %1227 = vmatpush1.msra.mxu0 %v1201
    %1228 = vmatprep.subr.mxu0 0.0
    %1229 = vmatpush1.msra.mxu0 %v1202
    %1230 = vmatprep.subr.mxu0 0.0
    %1231 = vmatpush1.msra.mxu0 %v1203
    %1232 = vmatprep.subr.mxu0 0.0
    %1233 = vmatpush1.msra.mxu0 %v1204
    %1234 = vmatprep.subr.mxu0 0.0
    %1235 = vmatpush1.msra.mxu0 %v1205
    %1236 = vmatprep.subr.mxu0 0.0
    %1237 = vmatpush1.msra.mxu0 %v1206
    %1238 = vmatprep.subr.mxu0 0.0
    %1239 = vmatpush1.msra.mxu0 %v1207
    %1240 = vmatprep.subr.mxu0 0.0
    %1241 = vmatpush1.msra.mxu0 %v1208
    %1242 = vmatprep.subr.mxu0 0.0
    %1243 = vmatpush1.msra.mxu0 %v1209
    %1244 = vmatprep.subr.mxu0 0.0
    %1245 = vmatpush1.msra.mxu0 %v1210
    %1246 = vmatprep.subr.mxu0 0.0
    %1247 = vmatpush1.msra.mxu0 %v1211
    %1248 = vmatprep.subr.mxu0 0.0
    %1249 = vmatpush1.msra.mxu0 0.0
    %1250 = vmatprep.subr.mxu0 0.0
    %1251 = vmatpush1.msra.mxu0 0.0
    %1252 = vmatprep.subr.mxu0 0.0
    %1253 = vmatpush1.msra.mxu0 0.0
    %1254 = vmatprep.subr.mxu0 0.0
    %1255 = vmatpush1.msra.mxu0 0.0
    %1256 = vmatprep.subr.mxu0 0.0
    %1257 = vmatpush1.msra.mxu0 0.0
    %1258 = vmatprep.subr.mxu0 0.0
    %1259 = vmatpush1.msra.mxu0 0.0
    %1260 = vmatprep.subr.mxu0 0.0
    %1261 = vmatpush1.msra.mxu0 0.0
    %1262 = vmatprep.subr.mxu0 0.0
    %1263 = vmatpush1.msra.mxu0 0.0
    %1264 = vmatprep.subr.mxu0 0.0
    %1265 = vmatpush1.msra.mxu0 0.0
    %1266 = vmatprep.subr.mxu0 0.0
    %1267 = vmatpush1.msra.mxu0 0.0
    %1268 = vmatprep.subr.mxu0 0.0
    %1269 = vmatpush1.msra.mxu0 0.0
    %1270 = vmatprep.subr.mxu0 0.0
    %1271 = vmatpush1.msra.mxu0 0.0
    %1272 = vmatprep.subr.mxu0 0.0
    %1273 = vmatpush1.msra.mxu0 0.0
    %1274 = vmatprep.subr.mxu0 0.0
    %1275 = vmatpush1.msra.mxu0 0.0
    %1276 = vmatprep.subr.mxu0 0.0
    %1277 = vmatpush1.msra.mxu0 0.0
    %1278 = vmatprep.subr.mxu0 0.0
    %1279 = vmatpush1.msra.mxu0 0.0
    %1280 = vmatprep.mubr.f32.mxu0 0.0
    %1281 = vmatmul.mubr.f32.gmra.mrb[0].mxu0 %v1195
    %v1282 = vpop.f32.mrb[0].mxu0
    %v1283 = vadd.f32 %v1215, %v1282
    %v1284 = vpop.f32.mrb[0].mxu0
    %1285 = vdwg.mxu0
    %v1286 = vmax.f32 %v1283, 0.0
    %v1287 = vlaneseq
    %v1288 = vshrl.u32 %v1287, 7
    %v1289 = vsub.s32 3, %v1288
    %v1290 = vrot.slane %v51, %v1289
    %v1291 = vmul.f32 %v1286, %v1290
    %vm1292 = vcmask 1041408
    %v1293 = vsel %vm1292, %v1291, 0.0
    %1294 = vadd.xlane.f32.xlu0 %v1293
    %v1295 = vpop.xlane.xlu0 %1294
    %v1296 = vlaneseq
    %v1297 = vshrl.u32 %v1296, 7
    %v1298 = vsub.s32 4, %v1297
    %v1299 = vrot.slane %v51, %v1298
    %v1300 = vadd.f32 %v1295, %v1299
    %1302 = vrot.lane.b32.xlu0 %v986, 32
    %v1303 = vpop.permute.xlu0 %1302
    %1306 = vrot.lane.b32.xlu0 %v1300, 64
    %v1307 = vpop.permute.xlu0 %1306
    %v1309 = vsel %vm184, %v1303, %v980
    %v1310 = vsel %vm1006, %v1309, %v1307
    %vm1311 = vcmask 531456
    %v1312 = vsel %vm1311, %v1310, 0.0
    %v1313 = vsel %vm1292, %v1312, 0.0
    %1314 = vst [vmem:[%s6] sm:$0xff] %v1313
    // Predicated region
    $region30: #{critic_forward.1} parent=1 // pred_check
      _
    $region31: #{critic_forward.1} parent=1 // pred_check_branch
      %1316 = sbr.rel (0) target = $region33
    $region32: #{critic_forward.1} parent=1 // pred_region
      _
    $region33: #{critic_forward.1} parent=1 // pred_fallthru
      _
    // Predicated region
    $region34: #{critic_forward.1} parent=1 // pred_check
      _
    $region35: #{critic_forward.1} parent=1 // pred_check_branch
      %1318 = sbr.rel (0) target = $region37
    $region36: #{critic_forward.1} parent=1 // pred_region
      _
    $region37: #{critic_forward.1} parent=1 // pred_fallthru
      _
    %1319 = vsyncpa [#allocation5], 1
  %1320 = vsyncmov [#allocation3]
  %s1321 = vpop.sfrf %1320
  %p1322 = scmp.eq.s32.totalorder %s1321, 0
  %p1323 = pneg %p1322
  %1325 = shalt.err (%p1323)

</llo_original>
